<compile_context>
chip_gen: v7x
topology: tpu7x:2x2x1
jax: 0.10.0
libtpu: 0.0.40
codegen_flags: <defaults>
</compile_context>

<pallas_src>
import functools

import jax
import jax.numpy as jnp
from jax import lax
from jax.experimental import pallas as pl
from jax.experimental.pallas import tpu as pltpu

BN_EPS = 1e-5
MXU_DTYPE = jnp.bfloat16            # matmul-input dtype; accumulation is f32
TARGET_TILE_COLS = 2048             # lane-tile target (v5e could use ~1024)
VMEM_LIMIT_BYTES = 32 * 1024 * 1024  # raise scoped VMEM; well under v7x 64 MiB


# --------------------------------------------------------------------------
# Tiling: tiles contain whole sequences so conv padding masks stay in-tile.
# --------------------------------------------------------------------------
def _pick_tiling(batch, seq_len, target_cols=TARGET_TILE_COLS):
    n = batch * seq_len
    for tb in range(1, batch + 1):
        if batch % tb:
            continue
        cols = tb * seq_len
        if cols % 128:
            continue
        if cols >= target_cols:
            return batch // tb, cols
    return 1, n                      # whole slab (block == full array is legal)


# --------------------------------------------------------------------------
# Conv pass kernel: [fused prev-layer BN (+ReLU | +residual)] -> k=3 conv as
# one im2col MXU matmul (shortcut rows fused) -> per-tile partial BN stats.
# --------------------------------------------------------------------------
def _make_conv_pass_kernel(seq_len, tile_cols, pre_mode, n_sc_rows, emit_x,
                           cout_main):
    pow2 = (seq_len & (seq_len - 1)) == 0

    def kernel(*refs):
        i = 0
        act_ref = refs[i]; i += 1
        ss_ref = res_ref = None
        if pre_mode in ("norm_relu", "norm_res"):
            ss_ref = refs[i]; i += 1
        if pre_mode == "norm_res":
            res_ref = refs[i]; i += 1
        w_ref = refs[i]; i += 1
        y_ref = refs[i]; i += 1
        sc_ref = x_ref = None
        if n_sc_rows:
            sc_ref = refs[i]; i += 1
        if emit_x:
            x_ref = refs[i]; i += 1
        stats_ref = refs[i]

        h = act_ref[...]
        if pre_mode == "norm_relu":          # previous conv's BN + ReLU
            h = jnp.maximum(h * ss_ref[:, 0:1] + ss_ref[:, 1:2], 0.0)
        elif pre_mode == "norm_res":         # previous block's BN2 + shortcut add
            h = h * ss_ref[:, 0:1] + ss_ref[:, 1:2] + res_ref[...]
        if emit_x:                           # materialize block input (identity sc)
            x_ref[...] = h

        # Per-sequence zero-padding masks for the k=3 conv, from a lane iota.
        col = lax.broadcasted_iota(jnp.int32, (1, tile_cols), 1)
        if pow2:
            lpos = jnp.bitwise_and(col, seq_len - 1)
        else:
            lpos = lax.rem(col, jnp.full_like(col, seq_len))
        mask_prev = lpos != 0
        mask_next = lpos != (seq_len - 1)

        # im2col: [h[l-1]; h[l]; h[l+1]] stacked on the contraction (sublane)
        # axis; wrap-around of the lane roll is killed by the boundary masks.
        h_prev = jnp.where(mask_prev, pltpu.roll(h, shift=1, axis=1), 0.0)
        h_next = jnp.where(mask_next, pltpu.roll(h, shift=tile_cols - 1, axis=1), 0.0)
        hcat = jnp.concatenate([h_prev, h, h_next], axis=0).astype(w_ref.dtype)

        ycat = jnp.dot(w_ref[...], hcat, preferred_element_type=jnp.float32)
        y = ycat[:cout_main]
        y_ref[...] = y
        if n_sc_rows:                        # fused nn.Linear shortcut rows
            sc_ref[...] = ycat[cout_main:]

        # Per-tile partial BN statistics of the conv output.
        s = jnp.sum(y, axis=1, keepdims=True)
        q = jnp.sum(y * y, axis=1, keepdims=True)
        stats_ref[...] = jnp.concatenate([s, q], axis=1)[None]   # (1, Cout, 2)

    return kernel


def _finalize_kernel(y_ref, ss_ref, res_ref, out_ref):
    # Last block's BN2 (scale/shift form, Linear bias already folded) + shortcut.
    out_ref[...] = y_ref[...] * ss_ref[:, 0:1] + ss_ref[:, 1:2] + res_ref[...]


# --------------------------------------------------------------------------
# pallas_call wrappers
# --------------------------------------------------------------------------
def _compiler_params():
    return pltpu.CompilerParams(dimension_semantics=("parallel",),
                                vmem_limit_bytes=VMEM_LIMIT_BYTES)


def _run_conv_pass(act, ss, res, w, *, seq_len, tile_cols, n_tiles,
                   cout_main, n_sc_rows, emit_x, pre_mode):
    cin, n = act.shape
    tiled = lambda ch: pl.BlockSpec((ch, tile_cols), lambda i: (0, i))
    whole = lambda a: pl.BlockSpec(a.shape, lambda i: (0, 0))

    in_specs, args = [tiled(cin)], [act]
    if pre_mode in ("norm_relu", "norm_res"):
        in_specs.append(whole(ss)); args.append(ss)
    if pre_mode == "norm_res":
        in_specs.append(tiled(cin)); args.append(res)
    in_specs.append(whole(w)); args.append(w)

    out_shape = [jax.ShapeDtypeStruct((cout_main, n), jnp.float32)]
    out_specs = [tiled(cout_main)]
    if n_sc_rows:
        out_shape.append(jax.ShapeDtypeStruct((n_sc_rows, n), jnp.float32))
        out_specs.append(tiled(n_sc_rows))
    if emit_x:
        out_shape.append(jax.ShapeDtypeStruct((cin, n), jnp.float32))
        out_specs.append(tiled(cin))
    out_shape.append(jax.ShapeDtypeStruct((n_tiles, cout_main, 2), jnp.float32))
    out_specs.append(pl.BlockSpec((1, cout_main, 2), lambda i: (i, 0, 0)))

    return pl.pallas_call(
        _make_conv_pass_kernel(seq_len, tile_cols, pre_mode, n_sc_rows,
                               emit_x, cout_main),
        grid=(n_tiles,),
        in_specs=in_specs,
        out_specs=tuple(out_specs),
        out_shape=tuple(out_shape),
        compiler_params=_compiler_params(),
    )(*args)


def _run_finalize(y, ss, res, *, tile_cols, n_tiles):
    c, n = y.shape
    tiled = pl.BlockSpec((c, tile_cols), lambda i: (0, i))
    return pl.pallas_call(
        _finalize_kernel,
        grid=(n_tiles,),
        in_specs=[tiled, pl.BlockSpec(ss.shape, lambda i: (0, 0)), tiled],
        out_specs=tiled,
        out_shape=jax.ShapeDtypeStruct((c, n), jnp.float32),
        compiler_params=_compiler_params(),
    )(y, ss, res)


# --------------------------------------------------------------------------
# Tiny per-channel math (plain jnp) + weight preparation
# --------------------------------------------------------------------------
def _bn_scale_shift(partial_stats, gamma, beta, n_pos, extra_shift=None):
    s = jnp.sum(partial_stats, axis=0)                         # (C, 2)
    mean = s[:, 0] / n_pos
    var = jnp.maximum(s[:, 1] / n_pos - mean * mean, 0.0)      # biased (train BN)
    scale = gamma / jnp.sqrt(var + BN_EPS)
    shift = beta - mean * scale
    if extra_shift is not None:
        shift = shift + extra_shift                            # fold Linear bias
    return jnp.stack([scale, shift], axis=1)                   # (C, 2)


def _stack_taps(w):
    # (Cout, Cin, 3) conv weight -> (Cout, 3*Cin) matching [h_prev; h; h_next].
    cout, cin, k = w.shape
    return jnp.transpose(w, (0, 2, 1)).reshape(cout, k * cin)


def _conv1_weight(w1, wsc=None):
    # Conv1 im2col weight with the nn.Linear shortcut fused as extra rows that
    # only touch the middle (unshifted) tap -> one matmul gives conv1 + shortcut.
    w = _stack_taps(w1)                                        # (cin, 3*cin)
    if wsc is not None:
        cin = w1.shape[1]
        ext = jnp.zeros((wsc.shape[0], 3 * cin), w1.dtype)
        ext = ext.at[:, cin:2 * cin].set(wsc)
        w = jnp.concatenate([w, ext], axis=0)                  # (cin+cout, 3*cin)
    return w


# --------------------------------------------------------------------------
# Full model wrapper
# --------------------------------------------------------------------------
def single_channel_conv_cnn(x_bcl, block_params):
    b, c, l = x_bcl.shape
    n = b * l
    n_tiles, tile_cols = _pick_tiling(b, l)
    x2d = jnp.transpose(x_bcl, (1, 0, 2)).reshape(c, n)        # lane-dense (C, B*L)

    pending = None          # (raw conv2 output, BN2 scale/shift, residual slab)
    cin = c
    for p in block_params:
        cout = p["w2"].shape[0]
        linear = "wsc" in p
        emit_x = (not linear) and (pending is not None)

        w1 = _conv1_weight(p["w1"], p.get("wsc")).astype(MXU_DTYPE)
        if pending is None:
            pre_mode, act, ss_in, res_in = "none", x2d, None, None
        else:
            pre_mode = "norm_res"          # fuse previous block's BN2 + shortcut
            act, ss_in, res_in = pending

        outs = _run_conv_pass(act, ss_in, res_in, w1,
                              seq_len=l, tile_cols=tile_cols, n_tiles=n_tiles,
                              cout_main=cin, n_sc_rows=cout if linear else 0,
                              emit_x=emit_x, pre_mode=pre_mode)
        it = iter(outs)
        y1 = next(it)
        sc = next(it) if linear else None
        xb = next(it) if emit_x else None
        stats1 = next(it)

        res_b = sc if linear else (xb if pending is not None else x2d)
        ss1 = _bn_scale_shift(stats1, p["g1"], p["b1"], n)

        w2 = _stack_taps(p["w2"]).astype(MXU_DTYPE)
        y2, stats2 = _run_conv_pass(y1, ss1, None, w2,
                                    seq_len=l, tile_cols=tile_cols,
                                    n_tiles=n_tiles, cout_main=cout,
                                    n_sc_rows=0, emit_x=False,
                                    pre_mode="norm_relu")
        ss2 = _bn_scale_shift(stats2, p["g2"], p["b2"], n,
                              extra_shift=p.get("bsc"))
        pending = (y2, ss2, res_b)
        cin = cout

    y_last, ss_last, res_last = pending
    out2d = _run_finalize(y_last, ss_last, res_last,
                          tile_cols=tile_cols, n_tiles=n_tiles)
    return jnp.transpose(out2d.reshape(cin, b, l), (1, 0, 2))   # back to NCL


# --------------------------------------------------------------------------
# Deterministic parameter init (mirrors SingleChannelConvCNN.__init__ shapes)
# --------------------------------------------------------------------------
def init_params(key, in_channels, reduction_ratios, target_out_channels=None):
    blocks = []
    cin = in_channels
    for i, ratio in enumerate(reduction_ratios):
        last = i == len(reduction_ratios) - 1
        cout = (target_out_channels if (last and target_out_channels is not None)
                else int(cin * ratio))
        key, k0, k1, k2, k3, k4, k5, k6, k7 = jax.random.split(key, 9)
        p = {
            "w1": jax.random.normal(k0, (cin, cin, 3), jnp.float32) / jnp.sqrt(3.0 * cin),
            "g1": 1.0 + 0.1 * jax.random.normal(k1, (cin,), jnp.float32),
            "b1": 0.1 * jax.random.normal(k2, (cin,), jnp.float32),
            "w2": jax.random.normal(k3, (cout, cin, 3), jnp.float32) / jnp.sqrt(3.0 * cin),
            "g2": 1.0 + 0.1 * jax.random.normal(k4, (cout,), jnp.float32),
            "b2": 0.1 * jax.random.normal(k5, (cout,), jnp.float32),
        }
        if cin != cout:   # nn.Linear(cin, cout) shortcut; else nn.Identity
            p["wsc"] = jax.random.normal(k6, (cout, cin), jnp.float32) / jnp.sqrt(cin)
            p["bsc"] = 0.1 * jax.random.normal(k7, (cout,), jnp.float32)
        blocks.append(p)
        cin = cout
    return blocks


# --------------------------------------------------------------------------
# Pure-JAX reference (matches the PyTorch module, train-mode BN)
# --------------------------------------------------------------------------
def ref_conv_block(x, p):
    def bn(y, g, b):
        mean = y.mean(axis=(0, 2), keepdims=True)
        var = ((y - mean) ** 2).mean(axis=(0, 2), keepdims=True)
        return g[None, :, None] * (y - mean) / jnp.sqrt(var + BN_EPS) + b[None, :, None]

    conv = functools.partial(
        lax.conv_general_dilated, window_strides=(1,), padding=((1, 1),),
        dimension_numbers=("NCH", "OIH", "NCH"))
    h = conv(x, p["w1"])
    h = bn(h, p["g1"], p["b1"])
    h = jnp.maximum(h, 0.0)
    h = conv(h, p["w2"])
    h = bn(h, p["g2"], p["b2"])
    if "wsc" in p:
        sc = jnp.einsum("oc,bcl->bol", p["wsc"], x) + p["bsc"][None, :, None]
    else:
        sc = x
    return h + sc


def ref_model(x, block_params):
    for p in block_params:
        x = ref_conv_block(x, p)
    return x


# --------------------------------------------------------------------------
if __name__ == "__main__":
    key = jax.random.PRNGKey(0)

    def run_case(case_key, B, C, L, ratios):
        kx, kp = jax.random.split(case_key)
        x = jax.random.normal(kx, (B, C, L), jnp.float32)
        params = init_params(kp, in_channels=C, reduction_ratios=ratios)
        out = jax.block_until_ready(jax.jit(single_channel_conv_cnn)(x, params))
        ref = jax.block_until_ready(ref_model(x, params))
        assert out.shape == ref.shape, (out.shape, ref.shape)
        max_err = float(jnp.max(jnp.abs(out - ref)))
        assert bool(jnp.allclose(out, ref, atol=5e-2, rtol=5e-2)), (
            f"mismatch vs reference (ratios={ratios}), max abs err {max_err}")

    k1, k2 = jax.random.split(key)
    # Main config: in_channels=8, reduction_ratios=[2, 2], shortcut=True,
    # n_conv=2, batch_norm=True -> channels 8 -> 16 -> 32.  B*L = 128.
    run_case(k1, 2, 8, 64, [2, 2])
    # Also exercise the identity-shortcut (cin == cout) block path.
    run_case(k2, 2, 8, 64, [2, 1])

    print("KERNEL_OK")
</pallas_src>

<mosaic_0001>
module attributes {stable_mosaic.version = 11 : i64} {
  func.func @kernel(%arg0: i32, %arg1: memref<8x128xf32, #tpu.memory_space<vmem>>, %arg2: memref<24x24xbf16, #tpu.memory_space<vmem>>, %arg3: memref<8x128xf32, #tpu.memory_space<vmem>>, %arg4: memref<16x128xf32, #tpu.memory_space<vmem>>, %arg5: memref<1x8x2xf32, #tpu.memory_space<vmem>>) attributes {dimension_semantics = [#tpu.dimension_semantics<parallel>], iteration_bounds = array<i64: 1>, scalar_prefetch = 0 : i64, scratch_operands = 0 : i64, tpu.core_type = #tpu.core_type<tc>, window_params = [{transform_indices = @transform_0, window_bounds = array<i64: 8, 128>}, {pipeline_mode = #tpu.pipeline_mode<synchronous>, transform_indices = @transform_1, window_bounds = array<i64: 24, 24>}, {transform_indices = @transform_2, window_bounds = array<i64: 8, 128>}, {transform_indices = @transform_3, window_bounds = array<i64: 16, 128>}, {transform_indices = @transform_4, window_bounds = array<i64: 1, 8, 2>}]} {
    %c0 = arith.constant 0 : index
    %c0_0 = arith.constant 0 : index
    %0 = vector.load %arg1[%c0, %c0_0] : memref<8x128xf32, #tpu.memory_space<vmem>>, vector<8x128xf32>
    %1 = tpu.iota {dimensions = array<i32: 1>} : vector<1x128xi32>
    %c63_i32 = arith.constant 63 : i32
    %2 = vector.broadcast %c63_i32 : i32 to vector<1x128xi32>
    %3 = arith.andi %1, %2 : vector<1x128xi32>
    %c0_i32 = arith.constant 0 : i32
    %4 = vector.broadcast %c0_i32 : i32 to vector<1x128xi32>
    %5 = arith.cmpi ne, %3, %4 : vector<1x128xi32>
    %c63_i32_1 = arith.constant 63 : i32
    %6 = vector.broadcast %c63_i32_1 : i32 to vector<1x128xi32>
    %7 = arith.cmpi ne, %3, %6 : vector<1x128xi32>
    %c1_i32 = arith.constant 1 : i32
    %8 = tpu.dynamic_rotate %0 by %c1_i32 dim 1 : vector<8x128xf32>, i32 -> vector<8x128xf32>
    %cst = arith.constant 0.000000e+00 : f32
    %9 = vector.shape_cast %5 : vector<1x128xi1> to vector<1x128xi1>
    %10 = vector.broadcast %9 : vector<1x128xi1> to vector<8x128xi1>
    %11 = vector.broadcast %cst : f32 to vector<8x128xf32>
    %12 = arith.select %10, %8, %11 : vector<8x128xi1>, vector<8x128xf32>
    %c127_i32 = arith.constant 127 : i32
    %13 = tpu.dynamic_rotate %0 by %c127_i32 dim 1 : vector<8x128xf32>, i32 -> vector<8x128xf32>
    %cst_2 = arith.constant 0.000000e+00 : f32
    %14 = vector.shape_cast %7 : vector<1x128xi1> to vector<1x128xi1>
    %15 = vector.broadcast %14 : vector<1x128xi1> to vector<8x128xi1>
    %16 = vector.broadcast %cst_2 : f32 to vector<8x128xf32>
    %17 = arith.select %15, %13, %16 : vector<8x128xi1>, vector<8x128xf32>
    %18 = tpu.concatenate %12, %0, %17 in 0 : vector<8x128xf32>, vector<8x128xf32>, vector<8x128xf32> -> vector<24x128xf32>
    %19 = arith.truncf %18 : vector<24x128xf32> to vector<24x128xbf16>
    %c0_3 = arith.constant 0 : index
    %c0_4 = arith.constant 0 : index
    %20 = vector.load %arg2[%c0_3, %c0_4] : memref<24x24xbf16, #tpu.memory_space<vmem>>, vector<24x24xbf16>
    %cst_5 = arith.constant dense<0.000000e+00> : vector<24x128xf32>
    %21 = tpu.matmul %20, %19, %cst_5 {dimension_numbers = #tpu.dot_dimension_numbers<[1], [0], [0], [1], [0, 0, 1, 1], [], []>} : vector<24x24xbf16>, vector<24x128xbf16>, vector<24x128xf32> -> vector<24x128xf32>
    %22 = vector.extract_strided_slice %21 {offsets = [0, 0], sizes = [8, 128], strides = [1, 1]} : vector<24x128xf32> to vector<8x128xf32>
    %c0_6 = arith.constant 0 : index
    %c0_7 = arith.constant 0 : index
    %23 = vector.load %arg3[%c0_6, %c0_7] : memref<8x128xf32, #tpu.memory_space<vmem>>, vector<8x128xf32>
    tpu.vector_store %arg3[%c0_6, %c0_7], %22 {strides = array<i32>} : memref<8x128xf32, #tpu.memory_space<vmem>>, vector<8x128xf32>,
    %24 = vector.extract_strided_slice %21 {offsets = [8, 0], sizes = [16, 128], strides = [1, 1]} : vector<24x128xf32> to vector<16x128xf32>
    %c0_8 = arith.constant 0 : index
    %c0_9 = arith.constant 0 : index
    %25 = vector.load %arg4[%c0_8, %c0_9] : memref<16x128xf32, #tpu.memory_space<vmem>>, vector<16x128xf32>
    tpu.vector_store %arg4[%c0_8, %c0_9], %24 {strides = array<i32>} : memref<16x128xf32, #tpu.memory_space<vmem>>, vector<16x128xf32>,
    %cst_10 = arith.constant dense<0.000000e+00> : vector<8xf32>
    %26 = vector.multi_reduction <add>, %22, %cst_10 [1] : vector<8x128xf32> to vector<8xf32>
    %27 = vector.shape_cast %26 : vector<8xf32> to vector<8x1xf32>
    %28 = arith.mulf %22, %22 : vector<8x128xf32>
    %cst_11 = arith.constant dense<0.000000e+00> : vector<8xf32>
    %29 = vector.multi_reduction <add>, %28, %cst_11 [1] : vector<8x128xf32> to vector<8xf32>
    %30 = vector.shape_cast %29 : vector<8xf32> to vector<8x1xf32>
    %31 = tpu.concatenate %27, %30 in 1 : vector<8x1xf32>, vector<8x1xf32> -> vector<8x2xf32>
    %32 = vector.shape_cast %31 : vector<8x2xf32> to vector<1x8x2xf32>
    %c0_12 = arith.constant 0 : index
    %c0_13 = arith.constant 0 : index
    %c0_14 = arith.constant 0 : index
    %33 = vector.load %arg5[%c0_12, %c0_13, %c0_14] : memref<1x8x2xf32, #tpu.memory_space<vmem>>, vector<1x8x2xf32>
    tpu.vector_store %arg5[%c0_12, %c0_13, %c0_14], %32 {strides = array<i32>} : memref<1x8x2xf32, #tpu.memory_space<vmem>>, vector<1x8x2xf32>,
    return
  }
  func.func @transform_0(%arg0: i32) -> (i32, i32) {
    %c0_i32 = arith.constant 0 : i32
    %c0_i32_0 = arith.constant 0 : i32
    return %c0_i32, %arg0 : i32, i32
  }
  func.func @transform_1(%arg0: i32) -> (i32, i32) {
    %c0_i32 = arith.constant 0 : i32
    %c0_i32_0 = arith.constant 0 : i32
    %c0_i32_1 = arith.constant 0 : i32
    return %c0_i32, %c0_i32_0 : i32, i32
  }
  func.func @transform_2(%arg0: i32) -> (i32, i32) {
    %c0_i32 = arith.constant 0 : i32
    %c0_i32_0 = arith.constant 0 : i32
    return %c0_i32, %arg0 : i32, i32
  }
  func.func @transform_3(%arg0: i32) -> (i32, i32) {
    %c0_i32 = arith.constant 0 : i32
    %c0_i32_0 = arith.constant 0 : i32
    return %c0_i32, %arg0 : i32, i32
  }
  func.func @transform_4(%arg0: i32) -> (i32, i32, i32) {
    %c0_i32 = arith.constant 0 : i32
    %c0_i32_0 = arith.constant 0 : i32
    %c0_i32_1 = arith.constant 0 : i32
    return %arg0, %c0_i32, %c0_i32_0 : i32, i32, i32
  }
}

module attributes {stable_mosaic.version = 11 : i64} {
  func.func @kernel(%arg0: i32, %arg1: memref<8x128xf32, #tpu.memory_space<vmem>>, %arg2: memref<8x2xf32, #tpu.memory_space<vmem>>, %arg3: memref<16x24xbf16, #tpu.memory_space<vmem>>, %arg4: memref<16x128xf32, #tpu.memory_space<vmem>>, %arg5: memref<1x16x2xf32, #tpu.memory_space<vmem>>) attributes {dimension_semantics = [#tpu.dimension_semantics<parallel>], iteration_bounds = array<i64: 1>, scalar_prefetch = 0 : i64, scratch_operands = 0 : i64, tpu.core_type = #tpu.core_type<tc>, window_params = [{transform_indices = @transform_0, window_bounds = array<i64: 8, 128>}, {pipeline_mode = #tpu.pipeline_mode<synchronous>, transform_indices = @transform_1, window_bounds = array<i64: 8, 2>}, {pipeline_mode = #tpu.pipeline_mode<synchronous>, transform_indices = @transform_2, window_bounds = array<i64: 16, 24>}, {transform_indices = @transform_3, window_bounds = array<i64: 16, 128>}, {transform_indices = @transform_4, window_bounds = array<i64: 1, 16, 2>}]} {
    %c0 = arith.constant 0 : index
    %c0_0 = arith.constant 0 : index
    %0 = vector.load %arg1[%c0, %c0_0] : memref<8x128xf32, #tpu.memory_space<vmem>>, vector<8x128xf32>
    %c0_1 = arith.constant 0 : index
    %c0_2 = arith.constant 0 : index
    %1 = vector.load %arg2[%c0_1, %c0_2] : memref<8x2xf32, #tpu.memory_space<vmem>>, vector<8x1xf32>
    %2 = vector.broadcast %1 : vector<8x1xf32> to vector<8x128xf32>
    %3 = arith.mulf %0, %2 : vector<8x128xf32>
    %c0_3 = arith.constant 0 : index
    %c1 = arith.constant 1 : index
    %4 = vector.load %arg2[%c0_3, %c1] : memref<8x2xf32, #tpu.memory_space<vmem>>, vector<8x1xf32>
    %5 = vector.broadcast %4 : vector<8x1xf32> to vector<8x128xf32>
    %6 = arith.addf %3, %5 : vector<8x128xf32>
    %cst = arith.constant 0.000000e+00 : f32
    %7 = vector.broadcast %cst : f32 to vector<8x128xf32>
    %8 = arith.maximumf %6, %7 : vector<8x128xf32>
    %9 = tpu.iota {dimensions = array<i32: 1>} : vector<1x128xi32>
    %c63_i32 = arith.constant 63 : i32
    %10 = vector.broadcast %c63_i32 : i32 to vector<1x128xi32>
    %11 = arith.andi %9, %10 : vector<1x128xi32>
    %c0_i32 = arith.constant 0 : i32
    %12 = vector.broadcast %c0_i32 : i32 to vector<1x128xi32>
    %13 = arith.cmpi ne, %11, %12 : vector<1x128xi32>
    %c63_i32_4 = arith.constant 63 : i32
    %14 = vector.broadcast %c63_i32_4 : i32 to vector<1x128xi32>
    %15 = arith.cmpi ne, %11, %14 : vector<1x128xi32>
    %c1_i32 = arith.constant 1 : i32
    %16 = tpu.dynamic_rotate %8 by %c1_i32 dim 1 : vector<8x128xf32>, i32 -> vector<8x128xf32>
    %cst_5 = arith.constant 0.000000e+00 : f32
    %17 = vector.shape_cast %13 : vector<1x128xi1> to vector<1x128xi1>
    %18 = vector.broadcast %17 : vector<1x128xi1> to vector<8x128xi1>
    %19 = vector.broadcast %cst_5 : f32 to vector<8x128xf32>
    %20 = arith.select %18, %16, %19 : vector<8x128xi1>, vector<8x128xf32>
    %c127_i32 = arith.constant 127 : i32
    %21 = tpu.dynamic_rotate %8 by %c127_i32 dim 1 : vector<8x128xf32>, i32 -> vector<8x128xf32>
    %cst_6 = arith.constant 0.000000e+00 : f32
    %22 = vector.shape_cast %15 : vector<1x128xi1> to vector<1x128xi1>
    %23 = vector.broadcast %22 : vector<1x128xi1> to vector<8x128xi1>
    %24 = vector.broadcast %cst_6 : f32 to vector<8x128xf32>
    %25 = arith.select %23, %21, %24 : vector<8x128xi1>, vector<8x128xf32>
    %26 = tpu.concatenate %20, %8, %25 in 0 : vector<8x128xf32>, vector<8x128xf32>, vector<8x128xf32> -> vector<24x128xf32>
    %27 = arith.truncf %26 : vector<24x128xf32> to vector<24x128xbf16>
    %c0_7 = arith.constant 0 : index
    %c0_8 = arith.constant 0 : index
    %28 = vector.load %arg3[%c0_7, %c0_8] : memref<16x24xbf16, #tpu.memory_space<vmem>>, vector<16x24xbf16>
    %cst_9 = arith.constant dense<0.000000e+00> : vector<16x128xf32>
    %29 = tpu.matmul %28, %27, %cst_9 {dimension_numbers = #tpu.dot_dimension_numbers<[1], [0], [0], [1], [0, 0, 1, 1], [], []>} : vector<16x24xbf16>, vector<24x128xbf16>, vector<16x128xf32> -> vector<16x128xf32>
    %c0_10 = arith.constant 0 : index
    %c0_11 = arith.constant 0 : index
    %30 = vector.load %arg4[%c0_10, %c0_11] : memref<16x128xf32, #tpu.memory_space<vmem>>, vector<16x128xf32>
    tpu.vector_store %arg4[%c0_10, %c0_11], %29 {strides = array<i32>} : memref<16x128xf32, #tpu.memory_space<vmem>>, vector<16x128xf32>,
    %cst_12 = arith.constant dense<0.000000e+00> : vector<16xf32>
    %31 = vector.multi_reduction <add>, %29, %cst_12 [1] : vector<16x128xf32> to vector<16xf32>
    %32 = vector.shape_cast %31 : vector<16xf32> to vector<16x1xf32>
    %33 = arith.mulf %29, %29 : vector<16x128xf32>
    %cst_13 = arith.constant dense<0.000000e+00> : vector<16xf32>
    %34 = vector.multi_reduction <add>, %33, %cst_13 [1] : vector<16x128xf32> to vector<16xf32>
    %35 = vector.shape_cast %34 : vector<16xf32> to vector<16x1xf32>
    %36 = tpu.concatenate %32, %35 in 1 : vector<16x1xf32>, vector<16x1xf32> -> vector<16x2xf32>
    %37 = vector.shape_cast %36 : vector<16x2xf32> to vector<1x16x2xf32>
    %c0_14 = arith.constant 0 : index
    %c0_15 = arith.constant 0 : index
    %c0_16 = arith.constant 0 : index
    %38 = vector.load %arg5[%c0_14, %c0_15, %c0_16] : memref<1x16x2xf32, #tpu.memory_space<vmem>>, vector<1x16x2xf32>
    tpu.vector_store %arg5[%c0_14, %c0_15, %c0_16], %37 {strides = array<i32>} : memref<1x16x2xf32, #tpu.memory_space<vmem>>, vector<1x16x2xf32>,
    return
  }
  func.func @transform_0(%arg0: i32) -> (i32, i32) {
    %c0_i32 = arith.constant 0 : i32
    %c0_i32_0 = arith.constant 0 : i32
    return %c0_i32, %arg0 : i32, i32
  }
  func.func @transform_1(%arg0: i32) -> (i32, i32) {
    %c0_i32 = arith.constant 0 : i32
    %c0_i32_0 = arith.constant 0 : i32
    %c0_i32_1 = arith.constant 0 : i32
    return %c0_i32, %c0_i32_0 : i32, i32
  }
  func.func @transform_2(%arg0: i32) -> (i32, i32) {
    %c0_i32 = arith.constant 0 : i32
    %c0_i32_0 = arith.constant 0 : i32
    %c0_i32_1 = arith.constant 0 : i32
    return %c0_i32, %c0_i32_0 : i32, i32
  }
  func.func @transform_3(%arg0: i32) -> (i32, i32) {
    %c0_i32 = arith.constant 0 : i32
    %c0_i32_0 = arith.constant 0 : i32
    return %c0_i32, %arg0 : i32, i32
  }
  func.func @transform_4(%arg0: i32) -> (i32, i32, i32) {
    %c0_i32 = arith.constant 0 : i32
    %c0_i32_0 = arith.constant 0 : i32
    %c0_i32_1 = arith.constant 0 : i32
    return %arg0, %c0_i32, %c0_i32_0 : i32, i32, i32
  }
}

module attributes {stable_mosaic.version = 11 : i64} {
  func.func @kernel(%arg0: i32, %arg1: memref<16x128xf32, #tpu.memory_space<vmem>>, %arg2: memref<16x2xf32, #tpu.memory_space<vmem>>, %arg3: memref<16x128xf32, #tpu.memory_space<vmem>>, %arg4: memref<48x48xbf16, #tpu.memory_space<vmem>>, %arg5: memref<16x128xf32, #tpu.memory_space<vmem>>, %arg6: memref<32x128xf32, #tpu.memory_space<vmem>>, %arg7: memref<1x16x2xf32, #tpu.memory_space<vmem>>) attributes {dimension_semantics = [#tpu.dimension_semantics<parallel>], iteration_bounds = array<i64: 1>, scalar_prefetch = 0 : i64, scratch_operands = 0 : i64, tpu.core_type = #tpu.core_type<tc>, window_params = [{transform_indices = @transform_0, window_bounds = array<i64: 16, 128>}, {pipeline_mode = #tpu.pipeline_mode<synchronous>, transform_indices = @transform_1, window_bounds = array<i64: 16, 2>}, {transform_indices = @transform_2, window_bounds = array<i64: 16, 128>}, {pipeline_mode = #tpu.pipeline_mode<synchronous>, transform_indices = @transform_3, window_bounds = array<i64: 48, 48>}, {transform_indices = @transform_4, window_bounds = array<i64: 16, 128>}, {transform_indices = @transform_5, window_bounds = array<i64: 32, 128>}, {transform_indices = @transform_6, window_bounds = array<i64: 1, 16, 2>}]} {
    %c0 = arith.constant 0 : index
    %c0_0 = arith.constant 0 : index
    %0 = vector.load %arg1[%c0, %c0_0] : memref<16x128xf32, #tpu.memory_space<vmem>>, vector<16x128xf32>
    %c0_1 = arith.constant 0 : index
    %c0_2 = arith.constant 0 : index
    %1 = vector.load %arg2[%c0_1, %c0_2] : memref<16x2xf32, #tpu.memory_space<vmem>>, vector<16x1xf32>
    %2 = vector.broadcast %1 : vector<16x1xf32> to vector<16x128xf32>
    %3 = arith.mulf %0, %2 : vector<16x128xf32>
    %c0_3 = arith.constant 0 : index
    %c1 = arith.constant 1 : index
    %4 = vector.load %arg2[%c0_3, %c1] : memref<16x2xf32, #tpu.memory_space<vmem>>, vector<16x1xf32>
    %5 = vector.broadcast %4 : vector<16x1xf32> to vector<16x128xf32>
    %6 = arith.addf %3, %5 : vector<16x128xf32>
    %c0_4 = arith.constant 0 : index
    %c0_5 = arith.constant 0 : index
    %7 = vector.load %arg3[%c0_4, %c0_5] : memref<16x128xf32, #tpu.memory_space<vmem>>, vector<16x128xf32>
    %8 = arith.addf %6, %7 : vector<16x128xf32>
    %9 = tpu.iota {dimensions = array<i32: 1>} : vector<1x128xi32>
    %c63_i32 = arith.constant 63 : i32
    %10 = vector.broadcast %c63_i32 : i32 to vector<1x128xi32>
    %11 = arith.andi %9, %10 : vector<1x128xi32>
    %c0_i32 = arith.constant 0 : i32
    %12 = vector.broadcast %c0_i32 : i32 to vector<1x128xi32>
    %13 = arith.cmpi ne, %11, %12 : vector<1x128xi32>
    %c63_i32_6 = arith.constant 63 : i32
    %14 = vector.broadcast %c63_i32_6 : i32 to vector<1x128xi32>
    %15 = arith.cmpi ne, %11, %14 : vector<1x128xi32>
    %c1_i32 = arith.constant 1 : i32
    %16 = tpu.dynamic_rotate %8 by %c1_i32 dim 1 : vector<16x128xf32>, i32 -> vector<16x128xf32>
    %cst = arith.constant 0.000000e+00 : f32
    %17 = vector.shape_cast %13 : vector<1x128xi1> to vector<1x128xi1>
    %18 = vector.broadcast %17 : vector<1x128xi1> to vector<16x128xi1>
    %19 = vector.broadcast %cst : f32 to vector<16x128xf32>
    %20 = arith.select %18, %16, %19 : vector<16x128xi1>, vector<16x128xf32>
    %c127_i32 = arith.constant 127 : i32
    %21 = tpu.dynamic_rotate %8 by %c127_i32 dim 1 : vector<16x128xf32>, i32 -> vector<16x128xf32>
    %cst_7 = arith.constant 0.000000e+00 : f32
    %22 = vector.shape_cast %15 : vector<1x128xi1> to vector<1x128xi1>
    %23 = vector.broadcast %22 : vector<1x128xi1> to vector<16x128xi1>
    %24 = vector.broadcast %cst_7 : f32 to vector<16x128xf32>
    %25 = arith.select %23, %21, %24 : vector<16x128xi1>, vector<16x128xf32>
    %26 = tpu.concatenate %20, %8, %25 in 0 : vector<16x128xf32>, vector<16x128xf32>, vector<16x128xf32> -> vector<48x128xf32>
    %27 = arith.truncf %26 : vector<48x128xf32> to vector<48x128xbf16>
    %c0_8 = arith.constant 0 : index
    %c0_9 = arith.constant 0 : index
    %28 = vector.load %arg4[%c0_8, %c0_9] : memref<48x48xbf16, #tpu.memory_space<vmem>>, vector<48x48xbf16>
    %cst_10 = arith.constant dense<0.000000e+00> : vector<48x128xf32>
    %29 = tpu.matmul %28, %27, %cst_10 {dimension_numbers = #tpu.dot_dimension_numbers<[1], [0], [0], [1], [0, 0, 1, 1], [], []>} : vector<48x48xbf16>, vector<48x128xbf16>, vector<48x128xf32> -> vector<48x128xf32>
    %30 = vector.extract_strided_slice %29 {offsets = [0, 0], sizes = [16, 128], strides = [1, 1]} : vector<48x128xf32> to vector<16x128xf32>
    %c0_11 = arith.constant 0 : index
    %c0_12 = arith.constant 0 : index
    %31 = vector.load %arg5[%c0_11, %c0_12] : memref<16x128xf32, #tpu.memory_space<vmem>>, vector<16x128xf32>
    tpu.vector_store %arg5[%c0_11, %c0_12], %30 {strides = array<i32>} : memref<16x128xf32, #tpu.memory_space<vmem>>, vector<16x128xf32>,
    %32 = vector.extract_strided_slice %29 {offsets = [16, 0], sizes = [32, 128], strides = [1, 1]} : vector<48x128xf32> to vector<32x128xf32>
    %c0_13 = arith.constant 0 : index
    %c0_14 = arith.constant 0 : index
    %33 = vector.load %arg6[%c0_13, %c0_14] : memref<32x128xf32, #tpu.memory_space<vmem>>, vector<32x128xf32>
    tpu.vector_store %arg6[%c0_13, %c0_14], %32 {strides = array<i32>} : memref<32x128xf32, #tpu.memory_space<vmem>>, vector<32x128xf32>,
    %cst_15 = arith.constant dense<0.000000e+00> : vector<16xf32>
    %34 = vector.multi_reduction <add>, %30, %cst_15 [1] : vector<16x128xf32> to vector<16xf32>
    %35 = vector.shape_cast %34 : vector<16xf32> to vector<16x1xf32>
    %36 = arith.mulf %30, %30 : vector<16x128xf32>
    %cst_16 = arith.constant dense<0.000000e+00> : vector<16xf32>
    %37 = vector.multi_reduction <add>, %36, %cst_16 [1] : vector<16x128xf32> to vector<16xf32>
    %38 = vector.shape_cast %37 : vector<16xf32> to vector<16x1xf32>
    %39 = tpu.concatenate %35, %38 in 1 : vector<16x1xf32>, vector<16x1xf32> -> vector<16x2xf32>
    %40 = vector.shape_cast %39 : vector<16x2xf32> to vector<1x16x2xf32>
    %c0_17 = arith.constant 0 : index
    %c0_18 = arith.constant 0 : index
    %c0_19 = arith.constant 0 : index
    %41 = vector.load %arg7[%c0_17, %c0_18, %c0_19] : memref<1x16x2xf32, #tpu.memory_space<vmem>>, vector<1x16x2xf32>
    tpu.vector_store %arg7[%c0_17, %c0_18, %c0_19], %40 {strides = array<i32>} : memref<1x16x2xf32, #tpu.memory_space<vmem>>, vector<1x16x2xf32>,
    return
  }
  func.func @transform_0(%arg0: i32) -> (i32, i32) {
    %c0_i32 = arith.constant 0 : i32
    %c0_i32_0 = arith.constant 0 : i32
    return %c0_i32, %arg0 : i32, i32
  }
  func.func @transform_1(%arg0: i32) -> (i32, i32) {
    %c0_i32 = arith.constant 0 : i32
    %c0_i32_0 = arith.constant 0 : i32
    %c0_i32_1 = arith.constant 0 : i32
    return %c0_i32, %c0_i32_0 : i32, i32
  }
  func.func @transform_2(%arg0: i32) -> (i32, i32) {
    %c0_i32 = arith.constant 0 : i32
    %c0_i32_0 = arith.constant 0 : i32
    return %c0_i32, %arg0 : i32, i32
  }
  func.func @transform_3(%arg0: i32) -> (i32, i32) {
    %c0_i32 = arith.constant 0 : i32
    %c0_i32_0 = arith.constant 0 : i32
    %c0_i32_1 = arith.constant 0 : i32
    return %c0_i32, %c0_i32_0 : i32, i32
  }
  func.func @transform_4(%arg0: i32) -> (i32, i32) {
    %c0_i32 = arith.constant 0 : i32
    %c0_i32_0 = arith.constant 0 : i32
    return %c0_i32, %arg0 : i32, i32
  }
  func.func @transform_5(%arg0: i32) -> (i32, i32) {
    %c0_i32 = arith.constant 0 : i32
    %c0_i32_0 = arith.constant 0 : i32
    return %c0_i32, %arg0 : i32, i32
  }
  func.func @transform_6(%arg0: i32) -> (i32, i32, i32) {
    %c0_i32 = arith.constant 0 : i32
    %c0_i32_0 = arith.constant 0 : i32
    %c0_i32_1 = arith.constant 0 : i32
    return %arg0, %c0_i32, %c0_i32_0 : i32, i32, i32
  }
}

module attributes {stable_mosaic.version = 11 : i64} {
  func.func @kernel(%arg0: i32, %arg1: memref<16x128xf32, #tpu.memory_space<vmem>>, %arg2: memref<16x2xf32, #tpu.memory_space<vmem>>, %arg3: memref<32x48xbf16, #tpu.memory_space<vmem>>, %arg4: memref<32x128xf32, #tpu.memory_space<vmem>>, %arg5: memref<1x32x2xf32, #tpu.memory_space<vmem>>) attributes {dimension_semantics = [#tpu.dimension_semantics<parallel>], iteration_bounds = array<i64: 1>, scalar_prefetch = 0 : i64, scratch_operands = 0 : i64, tpu.core_type = #tpu.core_type<tc>, window_params = [{transform_indices = @transform_0, window_bounds = array<i64: 16, 128>}, {pipeline_mode = #tpu.pipeline_mode<synchronous>, transform_indices = @transform_1, window_bounds = array<i64: 16, 2>}, {pipeline_mode = #tpu.pipeline_mode<synchronous>, transform_indices = @transform_2, window_bounds = array<i64: 32, 48>}, {transform_indices = @transform_3, window_bounds = array<i64: 32, 128>}, {transform_indices = @transform_4, window_bounds = array<i64: 1, 32, 2>}]} {
    %c0 = arith.constant 0 : index
    %c0_0 = arith.constant 0 : index
    %0 = vector.load %arg1[%c0, %c0_0] : memref<16x128xf32, #tpu.memory_space<vmem>>, vector<16x128xf32>
    %c0_1 = arith.constant 0 : index
    %c0_2 = arith.constant 0 : index
    %1 = vector.load %arg2[%c0_1, %c0_2] : memref<16x2xf32, #tpu.memory_space<vmem>>, vector<16x1xf32>
    %2 = vector.broadcast %1 : vector<16x1xf32> to vector<16x128xf32>
    %3 = arith.mulf %0, %2 : vector<16x128xf32>
    %c0_3 = arith.constant 0 : index
    %c1 = arith.constant 1 : index
    %4 = vector.load %arg2[%c0_3, %c1] : memref<16x2xf32, #tpu.memory_space<vmem>>, vector<16x1xf32>
    %5 = vector.broadcast %4 : vector<16x1xf32> to vector<16x128xf32>
    %6 = arith.addf %3, %5 : vector<16x128xf32>
    %cst = arith.constant 0.000000e+00 : f32
    %7 = vector.broadcast %cst : f32 to vector<16x128xf32>
    %8 = arith.maximumf %6, %7 : vector<16x128xf32>
    %9 = tpu.iota {dimensions = array<i32: 1>} : vector<1x128xi32>
    %c63_i32 = arith.constant 63 : i32
    %10 = vector.broadcast %c63_i32 : i32 to vector<1x128xi32>
    %11 = arith.andi %9, %10 : vector<1x128xi32>
    %c0_i32 = arith.constant 0 : i32
    %12 = vector.broadcast %c0_i32 : i32 to vector<1x128xi32>
    %13 = arith.cmpi ne, %11, %12 : vector<1x128xi32>
    %c63_i32_4 = arith.constant 63 : i32
    %14 = vector.broadcast %c63_i32_4 : i32 to vector<1x128xi32>
    %15 = arith.cmpi ne, %11, %14 : vector<1x128xi32>
    %c1_i32 = arith.constant 1 : i32
    %16 = tpu.dynamic_rotate %8 by %c1_i32 dim 1 : vector<16x128xf32>, i32 -> vector<16x128xf32>
    %cst_5 = arith.constant 0.000000e+00 : f32
    %17 = vector.shape_cast %13 : vector<1x128xi1> to vector<1x128xi1>
    %18 = vector.broadcast %17 : vector<1x128xi1> to vector<16x128xi1>
    %19 = vector.broadcast %cst_5 : f32 to vector<16x128xf32>
    %20 = arith.select %18, %16, %19 : vector<16x128xi1>, vector<16x128xf32>
    %c127_i32 = arith.constant 127 : i32
    %21 = tpu.dynamic_rotate %8 by %c127_i32 dim 1 : vector<16x128xf32>, i32 -> vector<16x128xf32>
    %cst_6 = arith.constant 0.000000e+00 : f32
    %22 = vector.shape_cast %15 : vector<1x128xi1> to vector<1x128xi1>
    %23 = vector.broadcast %22 : vector<1x128xi1> to vector<16x128xi1>
    %24 = vector.broadcast %cst_6 : f32 to vector<16x128xf32>
    %25 = arith.select %23, %21, %24 : vector<16x128xi1>, vector<16x128xf32>
    %26 = tpu.concatenate %20, %8, %25 in 0 : vector<16x128xf32>, vector<16x128xf32>, vector<16x128xf32> -> vector<48x128xf32>
    %27 = arith.truncf %26 : vector<48x128xf32> to vector<48x128xbf16>
    %c0_7 = arith.constant 0 : index
    %c0_8 = arith.constant 0 : index
    %28 = vector.load %arg3[%c0_7, %c0_8] : memref<32x48xbf16, #tpu.memory_space<vmem>>, vector<32x48xbf16>
    %cst_9 = arith.constant dense<0.000000e+00> : vector<32x128xf32>
    %29 = tpu.matmul %28, %27, %cst_9 {dimension_numbers = #tpu.dot_dimension_numbers<[1], [0], [0], [1], [0, 0, 1, 1], [], []>} : vector<32x48xbf16>, vector<48x128xbf16>, vector<32x128xf32> -> vector<32x128xf32>
    %c0_10 = arith.constant 0 : index
    %c0_11 = arith.constant 0 : index
    %30 = vector.load %arg4[%c0_10, %c0_11] : memref<32x128xf32, #tpu.memory_space<vmem>>, vector<32x128xf32>
    tpu.vector_store %arg4[%c0_10, %c0_11], %29 {strides = array<i32>} : memref<32x128xf32, #tpu.memory_space<vmem>>, vector<32x128xf32>,
    %cst_12 = arith.constant dense<0.000000e+00> : vector<32xf32>
    %31 = vector.multi_reduction <add>, %29, %cst_12 [1] : vector<32x128xf32> to vector<32xf32>
    %32 = vector.shape_cast %31 : vector<32xf32> to vector<32x1xf32>
    %33 = arith.mulf %29, %29 : vector<32x128xf32>
    %cst_13 = arith.constant dense<0.000000e+00> : vector<32xf32>
    %34 = vector.multi_reduction <add>, %33, %cst_13 [1] : vector<32x128xf32> to vector<32xf32>
    %35 = vector.shape_cast %34 : vector<32xf32> to vector<32x1xf32>
    %36 = tpu.concatenate %32, %35 in 1 : vector<32x1xf32>, vector<32x1xf32> -> vector<32x2xf32>
    %37 = vector.shape_cast %36 : vector<32x2xf32> to vector<1x32x2xf32>
    %c0_14 = arith.constant 0 : index
    %c0_15 = arith.constant 0 : index
    %c0_16 = arith.constant 0 : index
    %38 = vector.load %arg5[%c0_14, %c0_15, %c0_16] : memref<1x32x2xf32, #tpu.memory_space<vmem>>, vector<1x32x2xf32>
    tpu.vector_store %arg5[%c0_14, %c0_15, %c0_16], %37 {strides = array<i32>} : memref<1x32x2xf32, #tpu.memory_space<vmem>>, vector<1x32x2xf32>,
    return
  }
  func.func @transform_0(%arg0: i32) -> (i32, i32) {
    %c0_i32 = arith.constant 0 : i32
    %c0_i32_0 = arith.constant 0 : i32
    return %c0_i32, %arg0 : i32, i32
  }
  func.func @transform_1(%arg0: i32) -> (i32, i32) {
    %c0_i32 = arith.constant 0 : i32
    %c0_i32_0 = arith.constant 0 : i32
    %c0_i32_1 = arith.constant 0 : i32
    return %c0_i32, %c0_i32_0 : i32, i32
  }
  func.func @transform_2(%arg0: i32) -> (i32, i32) {
    %c0_i32 = arith.constant 0 : i32
    %c0_i32_0 = arith.constant 0 : i32
    %c0_i32_1 = arith.constant 0 : i32
    return %c0_i32, %c0_i32_0 : i32, i32
  }
  func.func @transform_3(%arg0: i32) -> (i32, i32) {
    %c0_i32 = arith.constant 0 : i32
    %c0_i32_0 = arith.constant 0 : i32
    return %c0_i32, %arg0 : i32, i32
  }
  func.func @transform_4(%arg0: i32) -> (i32, i32, i32) {
    %c0_i32 = arith.constant 0 : i32
    %c0_i32_0 = arith.constant 0 : i32
    %c0_i32_1 = arith.constant 0 : i32
    return %arg0, %c0_i32, %c0_i32_0 : i32, i32, i32
  }
}

module attributes {stable_mosaic.version = 11 : i64} {
  func.func @_finalize_kernel(%arg0: i32, %arg1: memref<32x128xf32, #tpu.memory_space<vmem>>, %arg2: memref<32x2xf32, #tpu.memory_space<vmem>>, %arg3: memref<32x128xf32, #tpu.memory_space<vmem>>, %arg4: memref<32x128xf32, #tpu.memory_space<vmem>>) attributes {dimension_semantics = [#tpu.dimension_semantics<parallel>], iteration_bounds = array<i64: 1>, scalar_prefetch = 0 : i64, scratch_operands = 0 : i64, tpu.core_type = #tpu.core_type<tc>, window_params = [{transform_indices = @transform_0, window_bounds = array<i64: 32, 128>}, {pipeline_mode = #tpu.pipeline_mode<synchronous>, transform_indices = @transform_1, window_bounds = array<i64: 32, 2>}, {transform_indices = @transform_2, window_bounds = array<i64: 32, 128>}, {transform_indices = @transform_3, window_bounds = array<i64: 32, 128>}]} {
    %c0 = arith.constant 0 : index
    %c0_0 = arith.constant 0 : index
    %0 = vector.load %arg1[%c0, %c0_0] : memref<32x128xf32, #tpu.memory_space<vmem>>, vector<32x128xf32>
    %c0_1 = arith.constant 0 : index
    %c0_2 = arith.constant 0 : index
    %1 = vector.load %arg2[%c0_1, %c0_2] : memref<32x2xf32, #tpu.memory_space<vmem>>, vector<32x1xf32>
    %2 = vector.broadcast %1 : vector<32x1xf32> to vector<32x128xf32>
    %3 = arith.mulf %0, %2 : vector<32x128xf32>
    %c0_3 = arith.constant 0 : index
    %c1 = arith.constant 1 : index
    %4 = vector.load %arg2[%c0_3, %c1] : memref<32x2xf32, #tpu.memory_space<vmem>>, vector<32x1xf32>
    %5 = vector.broadcast %4 : vector<32x1xf32> to vector<32x128xf32>
    %6 = arith.addf %3, %5 : vector<32x128xf32>
    %c0_4 = arith.constant 0 : index
    %c0_5 = arith.constant 0 : index
    %7 = vector.load %arg3[%c0_4, %c0_5] : memref<32x128xf32, #tpu.memory_space<vmem>>, vector<32x128xf32>
    %8 = arith.addf %6, %7 : vector<32x128xf32>
    %c0_6 = arith.constant 0 : index
    %c0_7 = arith.constant 0 : index
    %9 = vector.load %arg4[%c0_6, %c0_7] : memref<32x128xf32, #tpu.memory_space<vmem>>, vector<32x128xf32>
    tpu.vector_store %arg4[%c0_6, %c0_7], %8 {strides = array<i32>} : memref<32x128xf32, #tpu.memory_space<vmem>>, vector<32x128xf32>,
    return
  }
  func.func @transform_0(%arg0: i32) -> (i32, i32) {
    %c0_i32 = arith.constant 0 : i32
    %c0_i32_0 = arith.constant 0 : i32
    return %c0_i32, %arg0 : i32, i32
  }
  func.func @transform_1(%arg0: i32) -> (i32, i32) {
    %c0_i32 = arith.constant 0 : i32
    %c0_i32_0 = arith.constant 0 : i32
    %c0_i32_1 = arith.constant 0 : i32
    return %c0_i32, %c0_i32_0 : i32, i32
  }
  func.func @transform_2(%arg0: i32) -> (i32, i32) {
    %c0_i32 = arith.constant 0 : i32
    %c0_i32_0 = arith.constant 0 : i32
    return %c0_i32, %arg0 : i32, i32
  }
  func.func @transform_3(%arg0: i32) -> (i32, i32) {
    %c0_i32 = arith.constant 0 : i32
    %c0_i32_0 = arith.constant 0 : i32
    return %c0_i32, %arg0 : i32, i32
  }
}

</mosaic_0001>

<llo_original>
// kernel: single_channel_conv_cnn.6
$region0: #{single_channel_conv_cnn.6}
  #allocation0 [shape = 'u32[]', space=smem, size = 0x4, offset = 0x4, fixed_abs, tag = 'smem constant byte address 0x4 - core index']
  #allocation1 [shape = 'u32[144,128]{1,0:T(1,128)}', space=vmem, size = 0x12000, scoped, tag = 'internal scratch']
  %s0 = inlined_call_operand.vmem [shape: f32[8,128], index: 0, kind: input, shape index: {}]
  %s1 = inlined_call_operand.vmem [shape: f32[8,2], index: 1, kind: input, shape index: {}]
  %s2 = inlined_call_operand.vmem [shape: bf16[16,24], index: 2, kind: input, shape index: {}]
  %s3 = inlined_call_operand.vmem [shape: f32[16,128], index: 3, kind: output, shape index: {0}]
  %s4 = inlined_call_operand.vmem [shape: f32[1,16,2], index: 4, kind: output, shape index: {1}]
  %5 = xla_tuple %s3, %s4
  %s6 = sld [smem:[#allocation0]]
  $region30: #{single_channel_conv_cnn.6} parent=0
    _
  %s8 = ssub.s32 1, %s6
  %s9 = scalar_select 0, %s8, %s6
  // Predicated region
  $region2: #{single_channel_conv_cnn.6} parent=0 // pred_check
    _
  $region3: #{single_channel_conv_cnn.6} parent=0 // pred_check_branch
    %11 = sbr.rel (0) target = $region5
  $region4: #{single_channel_conv_cnn.6} parent=0 // pred_region
    _
  $region5: #{single_channel_conv_cnn.6} parent=0 // pred_fallthru
    _
  // Predicated region
  $region6: #{single_channel_conv_cnn.6} parent=0 // pred_check
    _
  $region7: #{single_channel_conv_cnn.6} parent=0 // pred_check_branch
    %13 = sbr.rel (0) target = $region9
  $region8: #{single_channel_conv_cnn.6} parent=0 // pred_region
    _
  $region9: #{single_channel_conv_cnn.6} parent=0 // pred_fallthru
    _
  // Predicated region
  $region10: #{single_channel_conv_cnn.6} parent=0 // pred_check
    _
  $region11: #{single_channel_conv_cnn.6} parent=0 // pred_check_branch
    %15 = sbr.rel (0) target = $region13
  $region12: #{single_channel_conv_cnn.6} parent=0 // pred_region
    _
  $region13: #{single_channel_conv_cnn.6} parent=0 // pred_fallthru
    _
  %v17 = vld [vmem:[%s0] sm:$0xff]
  %v18 = vld [vmem:[%s1] sm:$0xff]
  %20 = vset.pattern.permute.xlu0 0
  %21 = vperm.xlu0 %20, %v18
  %v22 = vpop.permute.xlu0 %21
  %v24 = vmul.f32 %v17, %v22
  %25 = vset.pattern.permute.xlu0 1
  %26 = vperm.xlu0 %25, %v18
  %v27 = vpop.permute.xlu0 %26
  %v29 = vadd.f32 %v24, %v27
  %v30 = vmax.f32 %v29, 0.0
  %v31 = vlaneseq
  %v32 = vand.u32 %v31, 127
  %v33 = vand.u32 %v32, 63
  %vm34 = vcmp.ne.s32.totalorder %v33, 0
  %vm35 = vcmp.ne.s32.totalorder %v33, 63
  %36 = vrot.lane.b32.xlu0 %v30, 1
  %v37 = vpop.permute.xlu0 %36
  %v38 = vsel %vm34, 1, 0
  %vm39 = vcmp.eq.s32.totalorder %v38, 1
  %v40 = vsel %vm39, %v37, 0.0
  %41 = vrot.lane.b32.xlu0 %v30, 127
  %v42 = vpop.permute.xlu0 %41
  %v43 = vsel %vm35, 1, 0
  %vm44 = vcmp.eq.s32.totalorder %v43, 1
  %v45 = vsel %vm44, %v42, 0.0
  %v46 = vpack.c.bf16 %v30, %v40
  %v47 = vpack.c.bf16 %v45, %v45
  %v48 = vld [vmem:[%s2] sm:$0xf]
  %v49 = vld [vmem:[%s2 + $0x4] sm:$0xf]
  %v52 = vunpack.c.l.b16 %v48
  %v53 = vunpack.c.l.b16 %v49
  %v54 = vpack.c.b16 %v53, %v52
  %vm55 = vcmask 195584
  %v57 = vsel %vm55, %v54, 0
  %vm59 = vcmask 1043456
  %v61 = vsel %vm59, %v47, 0
  %63 = vmatprep.subr.bf16.mxu0 0
  %64 = vmatpush1.bf16.msra.mxu0 %v46
  %65 = vmatprep.subr.bf16.mxu0 0
  %66 = vmatpush1.bf16.msra.mxu0 %v61
  %67 = vmatprep.subr.bf16.mxu0 0
  %68 = vmatpush1.bf16.msra.mxu0 0
  %69 = vmatprep.subr.bf16.mxu0 0
  %70 = vmatpush1.bf16.msra.mxu0 0
  %71 = vmatprep.subr.bf16.mxu0 0
  %72 = vmatpush1.bf16.msra.mxu0 0
  %73 = vmatprep.subr.bf16.mxu0 0
  %74 = vmatpush1.bf16.msra.mxu0 0
  %75 = vmatprep.subr.bf16.mxu0 0
  %76 = vmatpush1.bf16.msra.mxu0 0
  %77 = vmatprep.subr.bf16.mxu0 0
  %78 = vmatpush1.bf16.msra.mxu0 0
  %79 = vmatprep.subr.bf16.mxu0 0
  %80 = vmatpush1.bf16.msra.mxu0 0
  %81 = vmatprep.subr.bf16.mxu0 0
  %82 = vmatpush1.bf16.msra.mxu0 0
  %83 = vmatprep.subr.bf16.mxu0 0
  %84 = vmatpush1.bf16.msra.mxu0 0
  %85 = vmatprep.subr.bf16.mxu0 0
  %86 = vmatpush1.bf16.msra.mxu0 0
  %87 = vmatprep.subr.bf16.mxu0 0
  %88 = vmatpush1.bf16.msra.mxu0 0
  %89 = vmatprep.subr.bf16.mxu0 0
  %90 = vmatpush1.bf16.msra.mxu0 0
  %91 = vmatprep.subr.bf16.mxu0 0
  %92 = vmatpush1.bf16.msra.mxu0 0
  %93 = vmatprep.subr.bf16.mxu0 0
  %94 = vmatpush1.bf16.msra.mxu0 0
  %95 = vmatprep.mubr.bf16.mxu0 0
  %96 = vmatmul.mubr.bf16.gmra.mrb[0].mxu0 %v57
  %v97 = vpop.f32.mrb[0].mxu0
  %v98 = vadd.f32 0.0, %v97
  %v99 = vpop.f32.mrb[0].mxu0
  %v100 = vpop.f32.mrb[0].mxu0
  %v101 = vadd.f32 0.0, %v100
  %v102 = vpop.f32.mrb[0].mxu0
  %103 = vdwg.mxu0
  %104 = vst [vmem:[%s3] sm:$0xff] %v98
  %105 = vst [vmem:[%s3 + $0x8] sm:$0xff] %v101
  %106 = vadd.xlane.f32.xlu0 %v98
  %v107 = vpop.xlane.xlu0 %106
  %108 = vadd.xlane.f32.xlu0 %v101
  %v109 = vpop.xlane.xlu0 %108
  %v110 = vmul.f32 %v98, %v98
  %v111 = vmul.f32 %v101, %v101
  %112 = vadd.xlane.f32.xlu0 %v110
  %v113 = vpop.xlane.xlu0 %112
  %114 = vadd.xlane.f32.xlu0 %v111
  %v115 = vpop.xlane.xlu0 %114
  %vm116 = vcmask 7168
  %v117 = vsel %vm116, %v107, %v113
  %v118 = vsel %vm116, %v109, %v115
  %vm119 = vcmask 15360
  %120 = vst.msk [vmem:[%s4] sm:$0xff] %vm119, %v117
  %121 = vst.msk [vmem:[%s4 + $0x8] sm:$0xff] %vm119, %v118
  // Predicated region
  $region14: #{single_channel_conv_cnn.6} parent=0 // pred_check
    _
  $region15: #{single_channel_conv_cnn.6} parent=0 // pred_check_branch
    %123 = sbr.rel (0) target = $region17
  $region16: #{single_channel_conv_cnn.6} parent=0 // pred_region
    _
  $region17: #{single_channel_conv_cnn.6} parent=0 // pred_fallthru
    _
  // Predicated region
  $region18: #{single_channel_conv_cnn.6} parent=0 // pred_check
    _
  $region19: #{single_channel_conv_cnn.6} parent=0 // pred_check_branch
    %125 = sbr.rel (0) target = $region21
  $region20: #{single_channel_conv_cnn.6} parent=0 // pred_region
    _
  $region21: #{single_channel_conv_cnn.6} parent=0 // pred_fallthru
    _
  // Predicated region
  $region22: #{single_channel_conv_cnn.6} parent=0 // pred_check
    _
  $region23: #{single_channel_conv_cnn.6} parent=0 // pred_check_branch
    %127 = sbr.rel (0) target = $region25
  $region24: #{single_channel_conv_cnn.6} parent=0 // pred_region
    _
  $region25: #{single_channel_conv_cnn.6} parent=0 // pred_fallthru
    _
  // Predicated region
  $region26: #{single_channel_conv_cnn.6} parent=0 // pred_check
    _
  $region27: #{single_channel_conv_cnn.6} parent=0 // pred_check_branch
    %129 = sbr.rel (0) target = $region29
  $region28: #{single_channel_conv_cnn.6} parent=0 // pred_region
    _
  $region29: #{single_channel_conv_cnn.6} parent=0 // pred_fallthru
    _

// kernel: single_channel_conv_cnn.5
$region0: #{single_channel_conv_cnn.5}
  #allocation0 [shape = 'u32[]', space=smem, size = 0x4, offset = 0x4, fixed_abs, tag = 'smem constant byte address 0x4 - core index']
  #allocation1 [shape = 'u32[144,128]{1,0:T(1,128)}', space=vmem, size = 0x12000, scoped, tag = 'internal scratch']
  %s0 = inlined_call_operand.vmem [shape: f32[8,128], index: 0, kind: input, shape index: {}]
  %s1 = inlined_call_operand.vmem [shape: bf16[24,24], index: 1, kind: input, shape index: {}]
  %s2 = inlined_call_operand.vmem [shape: f32[8,128], index: 2, kind: output, shape index: {0}]
  %s3 = inlined_call_operand.vmem [shape: f32[16,128], index: 3, kind: output, shape index: {1}]
  %s4 = inlined_call_operand.vmem [shape: f32[1,8,2], index: 4, kind: output, shape index: {2}]
  %5 = xla_tuple %s2, %s3, %s4
  %s6 = sld [smem:[#allocation0]]
  $region34: #{single_channel_conv_cnn.5} parent=0
    _
  %s8 = ssub.s32 1, %s6
  %s9 = scalar_select 0, %s8, %s6
  // Predicated region
  $region2: #{single_channel_conv_cnn.5} parent=0 // pred_check
    _
  $region3: #{single_channel_conv_cnn.5} parent=0 // pred_check_branch
    %11 = sbr.rel (0) target = $region5
  $region4: #{single_channel_conv_cnn.5} parent=0 // pred_region
    _
  $region5: #{single_channel_conv_cnn.5} parent=0 // pred_fallthru
    _
  // Predicated region
  $region6: #{single_channel_conv_cnn.5} parent=0 // pred_check
    _
  $region7: #{single_channel_conv_cnn.5} parent=0 // pred_check_branch
    %13 = sbr.rel (0) target = $region9
  $region8: #{single_channel_conv_cnn.5} parent=0 // pred_region
    _
  $region9: #{single_channel_conv_cnn.5} parent=0 // pred_fallthru
    _
  %v15 = vld [vmem:[%s0] sm:$0xff]
  %v16 = vlaneseq
  %v17 = vand.u32 %v16, 127
  %v18 = vand.u32 %v17, 63
  %vm19 = vcmp.ne.s32.totalorder %v18, 0
  %vm20 = vcmp.ne.s32.totalorder %v18, 63
  %21 = vrot.lane.b32.xlu0 %v15, 1
  %v22 = vpop.permute.xlu0 %21
  %v23 = vsel %vm19, 1, 0
  %vm24 = vcmp.eq.s32.totalorder %v23, 1
  %v25 = vsel %vm24, %v22, 0.0
  %26 = vrot.lane.b32.xlu0 %v15, 127
  %v27 = vpop.permute.xlu0 %26
  %v28 = vsel %vm20, 1, 0
  %vm29 = vcmp.eq.s32.totalorder %v28, 1
  %v30 = vsel %vm29, %v27, 0.0
  %v31 = vpack.c.bf16 %v15, %v25
  %v32 = vpack.c.bf16 %v30, %v30
  %v33 = vld [vmem:[%s1] sm:$0xf]
  %v34 = vld [vmem:[%s1 + $0x4] sm:$0xf]
  %v35 = vld [vmem:[%s1 + $0x8] sm:$0xf]
  %v39 = vunpack.c.l.b16 %v33
  %v40 = vunpack.c.l.b16 %v34
  %v41 = vunpack.c.l.b16 %v35
  %v42 = vpack.c.b16 %v40, %v39
  %v43 = vpack.c.b16 %v41, %v41
  %vm44 = vcmask 195584
  %v46 = vsel %vm44, %v42, 0
  %v49 = vsel %vm44, %v43, 0
  %vm51 = vcmask 1043456
  %v53 = vsel %vm51, %v32, 0
  %55 = vmatprep.subr.bf16.mxu0 0
  %56 = vmatpush1.bf16.msra.mxu0 %v31
  %57 = vmatprep.subr.bf16.mxu0 0
  %58 = vmatpush1.bf16.msra.mxu0 %v53
  %59 = vmatprep.subr.bf16.mxu0 0
  %60 = vmatpush1.bf16.msra.mxu0 0
  %61 = vmatprep.subr.bf16.mxu0 0
  %62 = vmatpush1.bf16.msra.mxu0 0
  %63 = vmatprep.subr.bf16.mxu0 0
  %64 = vmatpush1.bf16.msra.mxu0 0
  %65 = vmatprep.subr.bf16.mxu0 0
  %66 = vmatpush1.bf16.msra.mxu0 0
  %67 = vmatprep.subr.bf16.mxu0 0
  %68 = vmatpush1.bf16.msra.mxu0 0
  %69 = vmatprep.subr.bf16.mxu0 0
  %70 = vmatpush1.bf16.msra.mxu0 0
  %71 = vmatprep.subr.bf16.mxu0 0
  %72 = vmatpush1.bf16.msra.mxu0 0
  %73 = vmatprep.subr.bf16.mxu0 0
  %74 = vmatpush1.bf16.msra.mxu0 0
  %75 = vmatprep.subr.bf16.mxu0 0
  %76 = vmatpush1.bf16.msra.mxu0 0
  %77 = vmatprep.subr.bf16.mxu0 0
  %78 = vmatpush1.bf16.msra.mxu0 0
  %79 = vmatprep.subr.bf16.mxu0 0
  %80 = vmatpush1.bf16.msra.mxu0 0
  %81 = vmatprep.subr.bf16.mxu0 0
  %82 = vmatpush1.bf16.msra.mxu0 0
  %83 = vmatprep.subr.bf16.mxu0 0
  %84 = vmatpush1.bf16.msra.mxu0 0
  %85 = vmatprep.subr.bf16.mxu0 0
  %86 = vmatpush1.bf16.msra.mxu0 0
  %87 = vmatprep.mubr.bf16.mxu0 0
  %88 = vmatmul.mubr.bf16.gmra.mrb[0].mxu0 %v46
  %v89 = vpop.f32.mrb[0].mxu0
  %v90 = vadd.f32 0.0, %v89
  %v91 = vpop.f32.mrb[0].mxu0
  %v92 = vpop.f32.mrb[0].mxu0
  %v93 = vadd.f32 0.0, %v92
  %v94 = vpop.f32.mrb[0].mxu0
  %95 = vmatprep.mubr.bf16.mxu0 0
  %96 = vmatmul.mubr.bf16.gmra.mrb[0].mxu0 %v49
  %v97 = vpop.f32.mrb[0].mxu0
  %v98 = vadd.f32 0.0, %v97
  %v99 = vpop.f32.mrb[0].mxu0
  %v100 = vpop.f32.mrb[0].mxu0
  %v101 = vpop.f32.mrb[0].mxu0
  %102 = vdwg.mxu0
  %103 = vst [vmem:[%s2] sm:$0xff] %v90
  %104 = vst [vmem:[%s3] sm:$0xff] %v93
  %105 = vst [vmem:[%s3 + $0x8] sm:$0xff] %v98
  %106 = vadd.xlane.f32.xlu0 %v90
  %v107 = vpop.xlane.xlu0 %106
  %v108 = vmul.f32 %v90, %v90
  %109 = vadd.xlane.f32.xlu0 %v108
  %v110 = vpop.xlane.xlu0 %109
  %vm111 = vcmask 7168
  %v112 = vsel %vm111, %v107, %v110
  %vm113 = vcmask 15360
  %114 = vst.msk [vmem:[%s4] sm:$0xff] %vm113, %v112
  // Predicated region
  $region10: #{single_channel_conv_cnn.5} parent=0 // pred_check
    _
  $region11: #{single_channel_conv_cnn.5} parent=0 // pred_check_branch
    %116 = sbr.rel (0) target = $region13
  $region12: #{single_channel_conv_cnn.5} parent=0 // pred_region
    _
  $region13: #{single_channel_conv_cnn.5} parent=0 // pred_fallthru
    _
  // Predicated region
  $region14: #{single_channel_conv_cnn.5} parent=0 // pred_check
    _
  $region15: #{single_channel_conv_cnn.5} parent=0 // pred_check_branch
    %118 = sbr.rel (0) target = $region17
  $region16: #{single_channel_conv_cnn.5} parent=0 // pred_region
    _
  $region17: #{single_channel_conv_cnn.5} parent=0 // pred_fallthru
    _
  // Predicated region
  $region18: #{single_channel_conv_cnn.5} parent=0 // pred_check
    _
  $region19: #{single_channel_conv_cnn.5} parent=0 // pred_check_branch
    %120 = sbr.rel (0) target = $region21
  $region20: #{single_channel_conv_cnn.5} parent=0 // pred_region
    _
  $region21: #{single_channel_conv_cnn.5} parent=0 // pred_fallthru
    _
  // Predicated region
  $region22: #{single_channel_conv_cnn.5} parent=0 // pred_check
    _
  $region23: #{single_channel_conv_cnn.5} parent=0 // pred_check_branch
    %122 = sbr.rel (0) target = $region25
  $region24: #{single_channel_conv_cnn.5} parent=0 // pred_region
    _
  $region25: #{single_channel_conv_cnn.5} parent=0 // pred_fallthru
    _
  // Predicated region
  $region26: #{single_channel_conv_cnn.5} parent=0 // pred_check
    _
  $region27: #{single_channel_conv_cnn.5} parent=0 // pred_check_branch
    %124 = sbr.rel (0) target = $region29
  $region28: #{single_channel_conv_cnn.5} parent=0 // pred_region
    _
  $region29: #{single_channel_conv_cnn.5} parent=0 // pred_fallthru
    _
  // Predicated region
  $region30: #{single_channel_conv_cnn.5} parent=0 // pred_check
    _
  $region31: #{single_channel_conv_cnn.5} parent=0 // pred_check_branch
    %126 = sbr.rel (0) target = $region33
  $region32: #{single_channel_conv_cnn.5} parent=0 // pred_region
    _
  $region33: #{single_channel_conv_cnn.5} parent=0 // pred_fallthru
    _

// kernel: single_channel_conv_cnn.7
$region0: #{single_channel_conv_cnn.7}
  #allocation0 [shape = 'u32[]', space=smem, size = 0x4, offset = 0x4, fixed_abs, tag = 'smem constant byte address 0x4 - core index']
  #allocation1 [shape = 'u32[144,128]{1,0:T(1,128)}', space=vmem, size = 0x12000, scoped, tag = 'internal scratch']
  %s0 = inlined_call_operand.vmem [shape: f32[16,128], index: 0, kind: input, shape index: {}]
  %s1 = inlined_call_operand.vmem [shape: f32[16,2], index: 1, kind: input, shape index: {}]
  %s2 = inlined_call_operand.vmem [shape: f32[16,128], index: 2, kind: input, shape index: {}]
  %s3 = inlined_call_operand.vmem [shape: bf16[48,48], index: 3, kind: input, shape index: {}]
  %s4 = inlined_call_operand.vmem [shape: f32[16,128], index: 4, kind: output, shape index: {0}]
  %s5 = inlined_call_operand.vmem [shape: f32[32,128], index: 5, kind: output, shape index: {1}]
  %s6 = inlined_call_operand.vmem [shape: f32[1,16,2], index: 6, kind: output, shape index: {2}]
  %7 = xla_tuple %s4, %s5, %s6
  %s8 = sld [smem:[#allocation0]]
  $region42: #{single_channel_conv_cnn.7} parent=0
    _
  %s10 = ssub.s32 1, %s8
  %s11 = scalar_select 0, %s10, %s8
  // Predicated region
  $region2: #{single_channel_conv_cnn.7} parent=0 // pred_check
    _
  $region3: #{single_channel_conv_cnn.7} parent=0 // pred_check_branch
    %13 = sbr.rel (0) target = $region5
  $region4: #{single_channel_conv_cnn.7} parent=0 // pred_region
    _
  $region5: #{single_channel_conv_cnn.7} parent=0 // pred_fallthru
    _
  // Predicated region
  $region6: #{single_channel_conv_cnn.7} parent=0 // pred_check
    _
  $region7: #{single_channel_conv_cnn.7} parent=0 // pred_check_branch
    %15 = sbr.rel (0) target = $region9
  $region8: #{single_channel_conv_cnn.7} parent=0 // pred_region
    _
  $region9: #{single_channel_conv_cnn.7} parent=0 // pred_fallthru
    _
  // Predicated region
  $region10: #{single_channel_conv_cnn.7} parent=0 // pred_check
    _
  $region11: #{single_channel_conv_cnn.7} parent=0 // pred_check_branch
    %17 = sbr.rel (0) target = $region13
  $region12: #{single_channel_conv_cnn.7} parent=0 // pred_region
    _
  $region13: #{single_channel_conv_cnn.7} parent=0 // pred_fallthru
    _
  // Predicated region
  $region14: #{single_channel_conv_cnn.7} parent=0 // pred_check
    _
  $region15: #{single_channel_conv_cnn.7} parent=0 // pred_check_branch
    %19 = sbr.rel (0) target = $region17
  $region16: #{single_channel_conv_cnn.7} parent=0 // pred_region
    _
  $region17: #{single_channel_conv_cnn.7} parent=0 // pred_fallthru
    _
  %v21 = vld [vmem:[%s0] sm:$0xff]
  %v22 = vld [vmem:[%s0 + $0x8] sm:$0xff]
  %v23 = vld [vmem:[%s1] sm:$0xff]
  %v24 = vld [vmem:[%s1 + $0x8] sm:$0xff]
  %26 = vset.pattern.permute.xlu0 0
  %27 = vperm.xlu0 %26, %v23
  %v28 = vpop.permute.xlu0 %27
  %31 = vset.pattern.permute.xlu0 0
  %32 = vperm.xlu0 %31, %v24
  %v33 = vpop.permute.xlu0 %32
  %v35 = vmul.f32 %v21, %v28
  %v36 = vmul.f32 %v22, %v33
  %37 = vset.pattern.permute.xlu0 1
  %38 = vperm.xlu0 %37, %v23
  %v39 = vpop.permute.xlu0 %38
  %41 = vset.pattern.permute.xlu0 1
  %42 = vperm.xlu0 %41, %v24
  %v43 = vpop.permute.xlu0 %42
  %v45 = vadd.f32 %v35, %v39
  %v46 = vadd.f32 %v36, %v43
  %v47 = vld [vmem:[%s2] sm:$0xff]
  %v48 = vld [vmem:[%s2 + $0x8] sm:$0xff]
  %v49 = vadd.f32 %v45, %v47
  %v50 = vadd.f32 %v46, %v48
  %v51 = vlaneseq
  %v52 = vand.u32 %v51, 127
  %v53 = vand.u32 %v52, 63
  %vm54 = vcmp.ne.s32.totalorder %v53, 0
  %vm55 = vcmp.ne.s32.totalorder %v53, 63
  %56 = vrot.lane.b32.xlu0 %v49, 1
  %v57 = vpop.permute.xlu0 %56
  %58 = vrot.lane.b32.xlu0 %v50, 1
  %v59 = vpop.permute.xlu0 %58
  %v60 = vsel %vm54, 1, 0
  %vm61 = vcmp.eq.s32.totalorder %v60, 1
  %v62 = vsel %vm61, %v57, 0.0
  %v63 = vsel %vm61, %v59, 0.0
  %64 = vrot.lane.b32.xlu0 %v49, 127
  %v65 = vpop.permute.xlu0 %64
  %66 = vrot.lane.b32.xlu0 %v50, 127
  %v67 = vpop.permute.xlu0 %66
  %v68 = vsel %vm55, 1, 0
  %vm69 = vcmp.eq.s32.totalorder %v68, 1
  %v70 = vsel %vm69, %v65, 0.0
  %v71 = vsel %vm69, %v67, 0.0
  %v72 = vpack.c.bf16 %v63, %v62
  %v73 = vpack.c.bf16 %v50, %v49
  %v74 = vpack.c.bf16 %v71, %v70
  %v75 = vld [vmem:[%s3] sm:$0xf]
  %v76 = vld [vmem:[%s3 + $0x4] sm:$0xf]
  %v77 = vld [vmem:[%s3 + $0x8] sm:$0xf]
  %v78 = vld [vmem:[%s3 + $0xc] sm:$0xf]
  %v79 = vld [vmem:[%s3 + $0x10] sm:$0xf]
  %v80 = vld [vmem:[%s3 + $0x14] sm:$0xf]
  %v87 = vunpack.c.l.b16 %v75
  %v88 = vunpack.c.l.b16 %v76
  %v89 = vunpack.c.l.b16 %v77
  %v90 = vunpack.c.l.b16 %v78
  %v91 = vunpack.c.l.b16 %v79
  %v92 = vunpack.c.l.b16 %v80
  %v93 = vpack.c.b16 %v88, %v87
  %v94 = vpack.c.b16 %v90, %v89
  %v95 = vpack.c.b16 %v92, %v91
  %vm96 = vcmask 392192
  %v98 = vsel %vm96, %v93, 0
  %v101 = vsel %vm96, %v94, 0
  %v104 = vsel %vm96, %v95, 0
  %106 = vmatprep.subr.bf16.mxu0 0
  %107 = vmatpush1.bf16.msra.mxu0 %v72
  %108 = vmatprep.subr.bf16.mxu0 0
  %109 = vmatpush1.bf16.msra.mxu0 %v73
  %110 = vmatprep.subr.bf16.mxu0 0
  %111 = vmatpush1.bf16.msra.mxu0 %v74
  %112 = vmatprep.subr.bf16.mxu0 0
  %113 = vmatpush1.bf16.msra.mxu0 0
  %114 = vmatprep.subr.bf16.mxu0 0
  %115 = vmatpush1.bf16.msra.mxu0 0
  %116 = vmatprep.subr.bf16.mxu0 0
  %117 = vmatpush1.bf16.msra.mxu0 0
  %118 = vmatprep.subr.bf16.mxu0 0
  %119 = vmatpush1.bf16.msra.mxu0 0
  %120 = vmatprep.subr.bf16.mxu0 0
  %121 = vmatpush1.bf16.msra.mxu0 0
  %122 = vmatprep.subr.bf16.mxu0 0
  %123 = vmatpush1.bf16.msra.mxu0 0
  %124 = vmatprep.subr.bf16.mxu0 0
  %125 = vmatpush1.bf16.msra.mxu0 0
  %126 = vmatprep.subr.bf16.mxu0 0
  %127 = vmatpush1.bf16.msra.mxu0 0
  %128 = vmatprep.subr.bf16.mxu0 0
  %129 = vmatpush1.bf16.msra.mxu0 0
  %130 = vmatprep.subr.bf16.mxu0 0
  %131 = vmatpush1.bf16.msra.mxu0 0
  %132 = vmatprep.subr.bf16.mxu0 0
  %133 = vmatpush1.bf16.msra.mxu0 0
  %134 = vmatprep.subr.bf16.mxu0 0
  %135 = vmatpush1.bf16.msra.mxu0 0
  %136 = vmatprep.subr.bf16.mxu0 0
  %137 = vmatpush1.bf16.msra.mxu0 0
  %138 = vmatprep.mubr.bf16.mxu0 0
  %139 = vmatmul.mubr.bf16.gmra.mrb[0].mxu0 %v98
  %v140 = vpop.f32.mrb[0].mxu0
  %v141 = vadd.f32 0.0, %v140
  %v142 = vpop.f32.mrb[0].mxu0
  %v143 = vpop.f32.mrb[0].mxu0
  %v144 = vadd.f32 0.0, %v143
  %v145 = vpop.f32.mrb[0].mxu0
  %146 = vmatprep.mubr.bf16.mxu0 0
  %147 = vmatmul.mubr.bf16.gmra.mrb[0].mxu0 %v101
  %v148 = vpop.f32.mrb[0].mxu0
  %v149 = vadd.f32 0.0, %v148
  %v150 = vpop.f32.mrb[0].mxu0
  %v151 = vpop.f32.mrb[0].mxu0
  %v152 = vadd.f32 0.0, %v151
  %v153 = vpop.f32.mrb[0].mxu0
  %154 = vmatprep.mubr.bf16.mxu0 0
  %155 = vmatmul.mubr.bf16.gmra.mrb[0].mxu0 %v104
  %v156 = vpop.f32.mrb[0].mxu0
  %v157 = vadd.f32 0.0, %v156
  %v158 = vpop.f32.mrb[0].mxu0
  %v159 = vpop.f32.mrb[0].mxu0
  %v160 = vadd.f32 0.0, %v159
  %v161 = vpop.f32.mrb[0].mxu0
  %162 = vdwg.mxu0
  %163 = vst [vmem:[%s4] sm:$0xff] %v141
  %164 = vst [vmem:[%s4 + $0x8] sm:$0xff] %v144
  %165 = vst [vmem:[%s5] sm:$0xff] %v149
  %166 = vst [vmem:[%s5 + $0x8] sm:$0xff] %v152
  %167 = vst [vmem:[%s5 + $0x10] sm:$0xff] %v157
  %168 = vst [vmem:[%s5 + $0x18] sm:$0xff] %v160
  %169 = vadd.xlane.f32.xlu0 %v141
  %v170 = vpop.xlane.xlu0 %169
  %171 = vadd.xlane.f32.xlu0 %v144
  %v172 = vpop.xlane.xlu0 %171
  %v173 = vmul.f32 %v141, %v141
  %v174 = vmul.f32 %v144, %v144
  %175 = vadd.xlane.f32.xlu0 %v173
  %v176 = vpop.xlane.xlu0 %175
  %177 = vadd.xlane.f32.xlu0 %v174
  %v178 = vpop.xlane.xlu0 %177
  %vm179 = vcmask 7168
  %v180 = vsel %vm179, %v170, %v176
  %v181 = vsel %vm179, %v172, %v178
  %vm182 = vcmask 15360
  %183 = vst.msk [vmem:[%s6] sm:$0xff] %vm182, %v180
  %184 = vst.msk [vmem:[%s6 + $0x8] sm:$0xff] %vm182, %v181
  // Predicated region
  $region18: #{single_channel_conv_cnn.7} parent=0 // pred_check
    _
  $region19: #{single_channel_conv_cnn.7} parent=0 // pred_check_branch
    %186 = sbr.rel (0) target = $region21
  $region20: #{single_channel_conv_cnn.7} parent=0 // pred_region
    _
  $region21: #{single_channel_conv_cnn.7} parent=0 // pred_fallthru
    _
  // Predicated region
  $region22: #{single_channel_conv_cnn.7} parent=0 // pred_check
    _
  $region23: #{single_channel_conv_cnn.7} parent=0 // pred_check_branch
    %188 = sbr.rel (0) target = $region25
  $region24: #{single_channel_conv_cnn.7} parent=0 // pred_region
    _
  $region25: #{single_channel_conv_cnn.7} parent=0 // pred_fallthru
    _
  // Predicated region
  $region26: #{single_channel_conv_cnn.7} parent=0 // pred_check
    _
  $region27: #{single_channel_conv_cnn.7} parent=0 // pred_check_branch
    %190 = sbr.rel (0) target = $region29
  $region28: #{single_channel_conv_cnn.7} parent=0 // pred_region
    _
  $region29: #{single_channel_conv_cnn.7} parent=0 // pred_fallthru
    _
  // Predicated region
  $region30: #{single_channel_conv_cnn.7} parent=0 // pred_check
    _
  $region31: #{single_channel_conv_cnn.7} parent=0 // pred_check_branch
    %192 = sbr.rel (0) target = $region33
  $region32: #{single_channel_conv_cnn.7} parent=0 // pred_region
    _
  $region33: #{single_channel_conv_cnn.7} parent=0 // pred_fallthru
    _
  // Predicated region
  $region34: #{single_channel_conv_cnn.7} parent=0 // pred_check
    _
  $region35: #{single_channel_conv_cnn.7} parent=0 // pred_check_branch
    %194 = sbr.rel (0) target = $region37
  $region36: #{single_channel_conv_cnn.7} parent=0 // pred_region
    _
  $region37: #{single_channel_conv_cnn.7} parent=0 // pred_fallthru
    _
  // Predicated region
  $region38: #{single_channel_conv_cnn.7} parent=0 // pred_check
    _
  $region39: #{single_channel_conv_cnn.7} parent=0 // pred_check_branch
    %196 = sbr.rel (0) target = $region41
  $region40: #{single_channel_conv_cnn.7} parent=0 // pred_region
    _
  $region41: #{single_channel_conv_cnn.7} parent=0 // pred_fallthru
    _

// kernel: single_channel_conv_cnn.8
$region0: #{single_channel_conv_cnn.8}
  #allocation0 [shape = 'u32[]', space=smem, size = 0x4, offset = 0x4, fixed_abs, tag = 'smem constant byte address 0x4 - core index']
  #allocation1 [shape = 'u32[144,128]{1,0:T(1,128)}', space=vmem, size = 0x12000, scoped, tag = 'internal scratch']
  %s0 = inlined_call_operand.vmem [shape: f32[16,128], index: 0, kind: input, shape index: {}]
  %s1 = inlined_call_operand.vmem [shape: f32[16,2], index: 1, kind: input, shape index: {}]
  %s2 = inlined_call_operand.vmem [shape: bf16[32,48], index: 2, kind: input, shape index: {}]
  %s3 = inlined_call_operand.vmem [shape: f32[32,128], index: 3, kind: output, shape index: {0}]
  %s4 = inlined_call_operand.vmem [shape: f32[1,32,2], index: 4, kind: output, shape index: {1}]
  %5 = xla_tuple %s3, %s4
  %s6 = sld [smem:[#allocation0]]
  $region30: #{single_channel_conv_cnn.8} parent=0
    _
  %s8 = ssub.s32 1, %s6
  %s9 = scalar_select 0, %s8, %s6
  // Predicated region
  $region2: #{single_channel_conv_cnn.8} parent=0 // pred_check
    _
  $region3: #{single_channel_conv_cnn.8} parent=0 // pred_check_branch
    %11 = sbr.rel (0) target = $region5
  $region4: #{single_channel_conv_cnn.8} parent=0 // pred_region
    _
  $region5: #{single_channel_conv_cnn.8} parent=0 // pred_fallthru
    _
  // Predicated region
  $region6: #{single_channel_conv_cnn.8} parent=0 // pred_check
    _
  $region7: #{single_channel_conv_cnn.8} parent=0 // pred_check_branch
    %13 = sbr.rel (0) target = $region9
  $region8: #{single_channel_conv_cnn.8} parent=0 // pred_region
    _
  $region9: #{single_channel_conv_cnn.8} parent=0 // pred_fallthru
    _
  // Predicated region
  $region10: #{single_channel_conv_cnn.8} parent=0 // pred_check
    _
  $region11: #{single_channel_conv_cnn.8} parent=0 // pred_check_branch
    %15 = sbr.rel (0) target = $region13
  $region12: #{single_channel_conv_cnn.8} parent=0 // pred_region
    _
  $region13: #{single_channel_conv_cnn.8} parent=0 // pred_fallthru
    _
  %v17 = vld [vmem:[%s0] sm:$0xff]
  %v18 = vld [vmem:[%s0 + $0x8] sm:$0xff]
  %v19 = vld [vmem:[%s1] sm:$0xff]
  %v20 = vld [vmem:[%s1 + $0x8] sm:$0xff]
  %22 = vset.pattern.permute.xlu0 0
  %23 = vperm.xlu0 %22, %v19
  %v24 = vpop.permute.xlu0 %23
  %27 = vset.pattern.permute.xlu0 0
  %28 = vperm.xlu0 %27, %v20
  %v29 = vpop.permute.xlu0 %28
  %v31 = vmul.f32 %v17, %v24
  %v32 = vmul.f32 %v18, %v29
  %33 = vset.pattern.permute.xlu0 1
  %34 = vperm.xlu0 %33, %v19
  %v35 = vpop.permute.xlu0 %34
  %37 = vset.pattern.permute.xlu0 1
  %38 = vperm.xlu0 %37, %v20
  %v39 = vpop.permute.xlu0 %38
  %v41 = vadd.f32 %v31, %v35
  %v42 = vadd.f32 %v32, %v39
  %v43 = vmax.f32 %v41, 0.0
  %v44 = vmax.f32 %v42, 0.0
  %v45 = vlaneseq
  %v46 = vand.u32 %v45, 127
  %v47 = vand.u32 %v46, 63
  %vm48 = vcmp.ne.s32.totalorder %v47, 0
  %vm49 = vcmp.ne.s32.totalorder %v47, 63
  %50 = vrot.lane.b32.xlu0 %v43, 1
  %v51 = vpop.permute.xlu0 %50
  %52 = vrot.lane.b32.xlu0 %v44, 1
  %v53 = vpop.permute.xlu0 %52
  %v54 = vsel %vm48, 1, 0
  %vm55 = vcmp.eq.s32.totalorder %v54, 1
  %v56 = vsel %vm55, %v51, 0.0
  %v57 = vsel %vm55, %v53, 0.0
  %58 = vrot.lane.b32.xlu0 %v43, 127
  %v59 = vpop.permute.xlu0 %58
  %60 = vrot.lane.b32.xlu0 %v44, 127
  %v61 = vpop.permute.xlu0 %60
  %v62 = vsel %vm49, 1, 0
  %vm63 = vcmp.eq.s32.totalorder %v62, 1
  %v64 = vsel %vm63, %v59, 0.0
  %v65 = vsel %vm63, %v61, 0.0
  %v66 = vpack.c.bf16 %v57, %v56
  %v67 = vpack.c.bf16 %v44, %v43
  %v68 = vpack.c.bf16 %v65, %v64
  %v69 = vld [vmem:[%s2] sm:$0xf]
  %v70 = vld [vmem:[%s2 + $0x4] sm:$0xf]
  %v71 = vld [vmem:[%s2 + $0x8] sm:$0xf]
  %v72 = vld [vmem:[%s2 + $0xc] sm:$0xf]
  %v77 = vunpack.c.l.b16 %v69
  %v78 = vunpack.c.l.b16 %v70
  %v79 = vunpack.c.l.b16 %v71
  %v80 = vunpack.c.l.b16 %v72
  %v81 = vpack.c.b16 %v78, %v77
  %v82 = vpack.c.b16 %v80, %v79
  %vm83 = vcmask 392192
  %v85 = vsel %vm83, %v81, 0
  %v88 = vsel %vm83, %v82, 0
  %90 = vmatprep.subr.bf16.mxu0 0
  %91 = vmatpush1.bf16.msra.mxu0 %v66
  %92 = vmatprep.subr.bf16.mxu0 0
  %93 = vmatpush1.bf16.msra.mxu0 %v67
  %94 = vmatprep.subr.bf16.mxu0 0
  %95 = vmatpush1.bf16.msra.mxu0 %v68
  %96 = vmatprep.subr.bf16.mxu0 0
  %97 = vmatpush1.bf16.msra.mxu0 0
  %98 = vmatprep.subr.bf16.mxu0 0
  %99 = vmatpush1.bf16.msra.mxu0 0
  %100 = vmatprep.subr.bf16.mxu0 0
  %101 = vmatpush1.bf16.msra.mxu0 0
  %102 = vmatprep.subr.bf16.mxu0 0
  %103 = vmatpush1.bf16.msra.mxu0 0
  %104 = vmatprep.subr.bf16.mxu0 0
  %105 = vmatpush1.bf16.msra.mxu0 0
  %106 = vmatprep.subr.bf16.mxu0 0
  %107 = vmatpush1.bf16.msra.mxu0 0
  %108 = vmatprep.subr.bf16.mxu0 0
  %109 = vmatpush1.bf16.msra.mxu0 0
  %110 = vmatprep.subr.bf16.mxu0 0
  %111 = vmatpush1.bf16.msra.mxu0 0
  %112 = vmatprep.subr.bf16.mxu0 0
  %113 = vmatpush1.bf16.msra.mxu0 0
  %114 = vmatprep.subr.bf16.mxu0 0
  %115 = vmatpush1.bf16.msra.mxu0 0
  %116 = vmatprep.subr.bf16.mxu0 0
  %117 = vmatpush1.bf16.msra.mxu0 0
  %118 = vmatprep.subr.bf16.mxu0 0
  %119 = vmatpush1.bf16.msra.mxu0 0
  %120 = vmatprep.subr.bf16.mxu0 0
  %121 = vmatpush1.bf16.msra.mxu0 0
  %122 = vmatprep.mubr.bf16.mxu0 0
  %123 = vmatmul.mubr.bf16.gmra.mrb[0].mxu0 %v85
  %v124 = vpop.f32.mrb[0].mxu0
  %v125 = vadd.f32 0.0, %v124
  %v126 = vpop.f32.mrb[0].mxu0
  %v127 = vpop.f32.mrb[0].mxu0
  %v128 = vadd.f32 0.0, %v127
  %v129 = vpop.f32.mrb[0].mxu0
  %130 = vmatprep.mubr.bf16.mxu0 0
  %131 = vmatmul.mubr.bf16.gmra.mrb[0].mxu0 %v88
  %v132 = vpop.f32.mrb[0].mxu0
  %v133 = vadd.f32 0.0, %v132
  %v134 = vpop.f32.mrb[0].mxu0
  %v135 = vpop.f32.mrb[0].mxu0
  %v136 = vadd.f32 0.0, %v135
  %v137 = vpop.f32.mrb[0].mxu0
  %138 = vdwg.mxu0
  %139 = vst [vmem:[%s3] sm:$0xff] %v125
  %140 = vst [vmem:[%s3 + $0x8] sm:$0xff] %v128
  %141 = vst [vmem:[%s3 + $0x10] sm:$0xff] %v133
  %142 = vst [vmem:[%s3 + $0x18] sm:$0xff] %v136
  %143 = vadd.xlane.f32.xlu0 %v125
  %v144 = vpop.xlane.xlu0 %143
  %145 = vadd.xlane.f32.xlu0 %v128
  %v146 = vpop.xlane.xlu0 %145
  %147 = vadd.xlane.f32.xlu0 %v133
  %v148 = vpop.xlane.xlu0 %147
  %149 = vadd.xlane.f32.xlu0 %v136
  %v150 = vpop.xlane.xlu0 %149
  %v151 = vmul.f32 %v125, %v125
  %v152 = vmul.f32 %v128, %v128
  %v153 = vmul.f32 %v133, %v133
  %v154 = vmul.f32 %v136, %v136
  %155 = vadd.xlane.f32.xlu0 %v151
  %v156 = vpop.xlane.xlu0 %155
  %157 = vadd.xlane.f32.xlu0 %v152
  %v158 = vpop.xlane.xlu0 %157
  %159 = vadd.xlane.f32.xlu0 %v153
  %v160 = vpop.xlane.xlu0 %159
  %161 = vadd.xlane.f32.xlu0 %v154
  %v162 = vpop.xlane.xlu0 %161
  %vm163 = vcmask 7168
  %v164 = vsel %vm163, %v144, %v156
  %v165 = vsel %vm163, %v146, %v158
  %v166 = vsel %vm163, %v148, %v160
  %v167 = vsel %vm163, %v150, %v162
  %vm168 = vcmask 15360
  %169 = vst.msk [vmem:[%s4] sm:$0xff] %vm168, %v164
  %170 = vst.msk [vmem:[%s4 + $0x8] sm:$0xff] %vm168, %v165
  %171 = vst.msk [vmem:[%s4 + $0x10] sm:$0xff] %vm168, %v166
  %172 = vst.msk [vmem:[%s4 + $0x18] sm:$0xff] %vm168, %v167
  // Predicated region
  $region14: #{single_channel_conv_cnn.8} parent=0 // pred_check
    _
  $region15: #{single_channel_conv_cnn.8} parent=0 // pred_check_branch
    %174 = sbr.rel (0) target = $region17
  $region16: #{single_channel_conv_cnn.8} parent=0 // pred_region
    _
  $region17: #{single_channel_conv_cnn.8} parent=0 // pred_fallthru
    _
  // Predicated region
  $region18: #{single_channel_conv_cnn.8} parent=0 // pred_check
    _
  $region19: #{single_channel_conv_cnn.8} parent=0 // pred_check_branch
    %176 = sbr.rel (0) target = $region21
  $region20: #{single_channel_conv_cnn.8} parent=0 // pred_region
    _
  $region21: #{single_channel_conv_cnn.8} parent=0 // pred_fallthru
    _
  // Predicated region
  $region22: #{single_channel_conv_cnn.8} parent=0 // pred_check
    _
  $region23: #{single_channel_conv_cnn.8} parent=0 // pred_check_branch
    %178 = sbr.rel (0) target = $region25
  $region24: #{single_channel_conv_cnn.8} parent=0 // pred_region
    _
  $region25: #{single_channel_conv_cnn.8} parent=0 // pred_fallthru
    _
  // Predicated region
  $region26: #{single_channel_conv_cnn.8} parent=0 // pred_check
    _
  $region27: #{single_channel_conv_cnn.8} parent=0 // pred_check_branch
    %180 = sbr.rel (0) target = $region29
  $region28: #{single_channel_conv_cnn.8} parent=0 // pred_region
    _
  $region29: #{single_channel_conv_cnn.8} parent=0 // pred_fallthru
    _

// kernel: single_channel_conv_cnn.9
$region0: #{single_channel_conv_cnn.9}
  #allocation0 [shape = 'u32[]', space=smem, size = 0x4, offset = 0x4, fixed_abs, tag = 'smem constant byte address 0x4 - core index']
  #allocation1 [shape = 'u32[144,128]{1,0:T(1,128)}', space=vmem, size = 0x12000, scoped, tag = 'internal scratch']
  %s0 = inlined_call_operand.vmem [shape: f32[32,128], index: 0, kind: input, shape index: {}]
  %s1 = inlined_call_operand.vmem [shape: f32[32,2], index: 1, kind: input, shape index: {}]
  %s2 = inlined_call_operand.vmem [shape: f32[32,128], index: 2, kind: input, shape index: {}]
  %s3 = inlined_call_operand.vmem [shape: f32[32,128], index: 3, kind: output, shape index: {}]
  %s4 = sld [smem:[#allocation0]]
  $region22: #{single_channel_conv_cnn.9} parent=0
    _
  %s6 = ssub.s32 1, %s4
  %s7 = scalar_select 0, %s6, %s4
  // Predicated region
  $region2: #{single_channel_conv_cnn.9} parent=0 // pred_check
    _
  $region3: #{single_channel_conv_cnn.9} parent=0 // pred_check_branch
    %9 = sbr.rel (0) target = $region5
  $region4: #{single_channel_conv_cnn.9} parent=0 // pred_region
    _
  $region5: #{single_channel_conv_cnn.9} parent=0 // pred_fallthru
    _
  // Predicated region
  $region6: #{single_channel_conv_cnn.9} parent=0 // pred_check
    _
  $region7: #{single_channel_conv_cnn.9} parent=0 // pred_check_branch
    %11 = sbr.rel (0) target = $region9
  $region8: #{single_channel_conv_cnn.9} parent=0 // pred_region
    _
  $region9: #{single_channel_conv_cnn.9} parent=0 // pred_fallthru
    _
  // Predicated region
  $region10: #{single_channel_conv_cnn.9} parent=0 // pred_check
    _
  $region11: #{single_channel_conv_cnn.9} parent=0 // pred_check_branch
    %13 = sbr.rel (0) target = $region13
  $region12: #{single_channel_conv_cnn.9} parent=0 // pred_region
    _
  $region13: #{single_channel_conv_cnn.9} parent=0 // pred_fallthru
    _
  %v14 = vld [vmem:[%s0] sm:$0xff]
  %v15 = vld [vmem:[%s0 + $0x8] sm:$0xff]
  %v16 = vld [vmem:[%s0 + $0x10] sm:$0xff]
  %v17 = vld [vmem:[%s0 + $0x18] sm:$0xff]
  %v18 = vld [vmem:[%s1] sm:$0xff]
  %v19 = vld [vmem:[%s1 + $0x8] sm:$0xff]
  %v20 = vld [vmem:[%s1 + $0x10] sm:$0xff]
  %v21 = vld [vmem:[%s1 + $0x18] sm:$0xff]
  %23 = vset.pattern.permute.xlu0 0
  %24 = vperm.xlu0 %23, %v18
  %v25 = vpop.permute.xlu0 %24
  %28 = vset.pattern.permute.xlu0 0
  %29 = vperm.xlu0 %28, %v19
  %v30 = vpop.permute.xlu0 %29
  %33 = vset.pattern.permute.xlu0 0
  %34 = vperm.xlu0 %33, %v20
  %v35 = vpop.permute.xlu0 %34
  %38 = vset.pattern.permute.xlu0 0
  %39 = vperm.xlu0 %38, %v21
  %v40 = vpop.permute.xlu0 %39
  %v42 = vmul.f32 %v14, %v25
  %v43 = vmul.f32 %v15, %v30
  %v44 = vmul.f32 %v16, %v35
  %v45 = vmul.f32 %v17, %v40
  %46 = vset.pattern.permute.xlu0 1
  %47 = vperm.xlu0 %46, %v18
  %v48 = vpop.permute.xlu0 %47
  %50 = vset.pattern.permute.xlu0 1
  %51 = vperm.xlu0 %50, %v19
  %v52 = vpop.permute.xlu0 %51
  %54 = vset.pattern.permute.xlu0 1
  %55 = vperm.xlu0 %54, %v20
  %v56 = vpop.permute.xlu0 %55
  %58 = vset.pattern.permute.xlu0 1
  %59 = vperm.xlu0 %58, %v21
  %v60 = vpop.permute.xlu0 %59
  %v62 = vadd.f32 %v42, %v48
  %v63 = vadd.f32 %v43, %v52
  %v64 = vadd.f32 %v44, %v56
  %v65 = vadd.f32 %v45, %v60
  %v66 = vld [vmem:[%s2] sm:$0xff]
  %v67 = vld [vmem:[%s2 + $0x8] sm:$0xff]
  %v68 = vld [vmem:[%s2 + $0x10] sm:$0xff]
  %v69 = vld [vmem:[%s2 + $0x18] sm:$0xff]
  %v70 = vadd.f32 %v62, %v66
  %v71 = vadd.f32 %v63, %v67
  %v72 = vadd.f32 %v64, %v68
  %v73 = vadd.f32 %v65, %v69
  %74 = vst [vmem:[%s3] sm:$0xff] %v70
  %75 = vst [vmem:[%s3 + $0x8] sm:$0xff] %v71
  %76 = vst [vmem:[%s3 + $0x10] sm:$0xff] %v72
  %77 = vst [vmem:[%s3 + $0x18] sm:$0xff] %v73
  // Predicated region
  $region14: #{single_channel_conv_cnn.9} parent=0 // pred_check
    _
  $region15: #{single_channel_conv_cnn.9} parent=0 // pred_check_branch
    %79 = sbr.rel (0) target = $region17
  $region16: #{single_channel_conv_cnn.9} parent=0 // pred_region
    _
  $region17: #{single_channel_conv_cnn.9} parent=0 // pred_fallthru
    _
  // Predicated region
  $region18: #{single_channel_conv_cnn.9} parent=0 // pred_check
    _
  $region19: #{single_channel_conv_cnn.9} parent=0 // pred_check_branch
    %81 = sbr.rel (0) target = $region21
  $region20: #{single_channel_conv_cnn.9} parent=0 // pred_region
    _
  $region21: #{single_channel_conv_cnn.9} parent=0 // pred_fallthru
    _

</llo_original>
